<compile_context>
chip_gen: v7x
topology: tpu7x:2x2x1
jax: 0.10.0
libtpu: 0.0.40
codegen_flags: <defaults>
</compile_context>

<pallas_src>
import numpy as np
import jax
import jax.numpy as jnp
from jax.experimental import pallas as pl
from jax.experimental.pallas import tpu as pltpu

EPS = 1e-5  # nn.BatchNorm2d default eps


# --------------------------------------------------------------------------- #
#                weight -> wide matmul matrices (host-side, once)              #
# --------------------------------------------------------------------------- #

def _xsel(s_in):
    """0/1 selector a[kx, ix, ox] = 1 iff kx == ox + 1 - 2*ix (no padding)."""
    s_out = 2 * s_in
    a = np.zeros((4, s_in, s_out), np.float32)
    for ox in range(s_out):
        for ix in range(s_in):
            kx = ox + 1 - 2 * ix
            if 0 <= kx < 4:
                a[kx, ix, ox] = 1.0
    return a


def _k_cat_stride2(w, s_in, pad_block_to=None):
    """K_cat for ConvTranspose2d(cin, cout, 4, 2, 1): (s_in*cin, 4*block).
    Rows = (ix, cin); per-ky column block = (ox, cout)."""
    cin, cout = w.shape[0], w.shape[1]
    s_out = 2 * s_in
    a = jnp.asarray(_xsel(s_in))
    blocks = []
    for ky in range(4):
        kb = jnp.einsum("kxo,cdk->xcod", a, w[:, :, ky, :])
        kb = kb.reshape(s_in * cin, s_out * cout)
        if pad_block_to is not None and pad_block_to > s_out * cout:
            kb = jnp.pad(kb, ((0, 0), (0, pad_block_to - s_out * cout)))
        blocks.append(kb)
    return jnp.concatenate(blocks, axis=1)


def _k_cat_layer1(w):
    """ConvTranspose2d(nz, c1, 4, 1, 0) on a 1x1 input: (nz, 16*c1); column
    blocks ordered by output row oy, inner columns = (ox, cout)."""
    nz, c1 = w.shape[0], w.shape[1]
    return jnp.transpose(w, (0, 2, 3, 1)).reshape(nz, 16 * c1)


def prepare_constants(params):
    """Precompute the 4 wide K matrices (bf16) and packed gamma/beta (f32)."""
    bf = jnp.bfloat16
    nc = params["w3"].shape[1]
    out_blk = ((32 * nc + 127) // 128) * 128            # lane-dense final store
    k1 = _k_cat_layer1(params["w0"]).astype(bf)          # (nz, 16*c1)
    k2 = _k_cat_stride2(params["w1"], 4).astype(bf)      # (4*c1, 4*8*c2)
    k3 = _k_cat_stride2(params["w2"], 8).astype(bf)      # (8*c2, 4*16*c3)
    k4 = _k_cat_stride2(params["w3"], 16, pad_block_to=out_blk).astype(bf)
    gb = [jnp.stack([params[f"gamma{i}"], params[f"beta{i}"]], axis=0)
          .astype(jnp.float32) for i in range(3)]        # (2, C) each
    return (k1, k2, k3, k4, gb[0], gb[1], gb[2])


# --------------------------------------------------------------------------- #
#                               fused Pallas kernel                            #
# --------------------------------------------------------------------------- #

def _generator_kernel(z_ref, k1_ref, k2_ref, k3_ref, k4_ref,
                      gb1_ref, gb2_ref, gb3_ref, o_ref):
    f32, bf16 = jnp.float32, jnp.bfloat16
    n = z_ref.shape[0]

    def bn_relu(y, gb_ref, s, c):
        """Training-mode BatchNorm2d (biased var) + ReLU.
        y: (n*s, s*c), rows=(batch, y), cols=(x, channel); count = n*s*s."""
        gb = gb_ref[...]                                       # (2, c) f32
        rs = jnp.sum(y, axis=0, keepdims=True)                 # (1, s*c)
        rq = jnp.sum(y * y, axis=0, keepdims=True)             # (1, s*c)
        sq = jnp.concatenate([rs, rq], axis=0)                 # (2, s*c)
        acc = sq[:, 0:c]
        for xg in range(1, s):                                 # fold over x (VPU)
            acc = acc + sq[:, xg * c:(xg + 1) * c]
        inv_count = 1.0 / float(y.shape[0] * s)
        mean = acc[0:1] * inv_count
        # TODO(synk): switch to Welford / two-pass variance when scaling up.
        var = acc[1:2] * inv_count - mean * mean
        scale = gb[0:1] * jax.lax.rsqrt(var + EPS)
        shift = gb[1:2] - mean * scale
        scale_t = jnp.concatenate([scale] * s, axis=1)         # lane tile, no MXU
        shift_t = jnp.concatenate([shift] * s, axis=1)
        return jnp.maximum(y * scale_t + shift_t, 0.0)

    def deconv_s2(a, k_ref, s_in, wblk, interleave):
        """ConvTranspose2d(4, s=2, p=1): one wide bf16 MXU matmul + row gather."""
        u = jnp.dot(a.astype(bf16), k_ref[...], preferred_element_type=f32)
        zrow = jnp.zeros((1, wblk), f32)
        pieces = []
        for b in range(n):
            r0 = b * s_in
            blk = [u[r0:r0 + s_in, t * wblk:(t + 1) * wblk] for t in range(4)]
            te = blk[1] + jnp.concatenate([zrow, blk[3][:s_in - 1]], axis=0)  # oy even
            to = blk[2] + jnp.concatenate([blk[0][1:], zrow], axis=0)         # oy odd
            if interleave:                      # natural row order for next layer
                for j in range(s_in):
                    pieces.append(te[j:j + 1])
                    pieces.append(to[j:j + 1])
            else:                               # block order; wrapper de-interleaves
                pieces.append(te)
                pieces.append(to)
        return jnp.concatenate(pieces, axis=0)

    # ---- layer 1: ConvTranspose2d(nz, c1, 4, 1, 0) on a 1x1 input ---------- #
    c1 = gb1_ref.shape[1]
    u1 = jnp.dot(z_ref[...].astype(bf16), k1_ref[...], preferred_element_type=f32)
    w1 = 4 * c1
    rows1 = [u1[b:b + 1, oy * w1:(oy + 1) * w1]
             for b in range(n) for oy in range(4)]
    a1 = bn_relu(jnp.concatenate(rows1, axis=0), gb1_ref, 4, c1)     # (n*4,  4*c1)

    # ---- layers 2..4 -------------------------------------------------------- #
    c2 = gb2_ref.shape[1]
    a2 = bn_relu(deconv_s2(a1, k2_ref, 4, 8 * c2, True), gb2_ref, 8, c2)    # (n*8,  8*c2)
    c3 = gb3_ref.shape[1]
    a3 = bn_relu(deconv_s2(a2, k3_ref, 8, 16 * c3, True), gb3_ref, 16, c3)  # (n*16, 16*c3)
    o_ref[...] = jnp.tanh(deconv_s2(a3, k4_ref, 16, o_ref.shape[1], False))  # (n*32, 128)


def generator_pix_forward(x_nchw, consts, nc=3):
    """Forward pass of Generator_pix. Input (N, nz, 1, 1) NCHW; output NCHW."""
    n = x_nchw.shape[0]
    k4 = consts[3]
    out_blk = k4.shape[1] // 4                          # 128 (lane-dense store)
    z = x_nchw.reshape(n, -1).astype(jnp.float32)       # (N, nz)
    n_in = 1 + len(consts)

    out2d = pl.pallas_call(
        _generator_kernel,
        out_shape=jax.ShapeDtypeStruct((n * 32, out_blk), jnp.float32),
        in_specs=[pl.BlockSpec(memory_space=pltpu.MemorySpace.VMEM)] * n_in,
        out_specs=pl.BlockSpec(memory_space=pltpu.MemorySpace.VMEM),
    )(z, *consts)

    # kernel rows = (batch, parity, j) with oy = 2*j + parity; cols = (ox, c)
    o = out2d[:, :32 * nc].reshape(n, 2, 16, 32, nc)
    o = jnp.transpose(o, (0, 4, 2, 1, 3))               # (b, c, j, parity, ox)
    return o.reshape(n, nc, 32, 32)                     # NCHW


# --------------------------------------------------------------------------- #
#                 pure-JAX reference (same construction as before)             #
# --------------------------------------------------------------------------- #

def conv_transpose_patches(x_nhwc, k, stride, pad):
    n, h, w, c = x_nhwc.shape
    if stride > 1:
        up = jnp.zeros((n, h, stride, w, stride, c), x_nhwc.dtype)
        up = up.at[:, :, 0, :, 0, :].set(x_nhwc)
        up = up.reshape(n, h * stride, w * stride, c)
        up = up[:, : (h - 1) * stride + 1, : (w - 1) * stride + 1, :]
    else:
        up = x_nhwc
    p = k - 1 - pad
    xp = jnp.pad(up, ((0, 0), (p, p), (p, p), (0, 0)))
    hp, wp = xp.shape[1], xp.shape[2]
    ho, wo = hp - k + 1, wp - k + 1
    cols = []
    for ky in range(k):
        for kx in range(k):
            cols.append(xp[:, ky:ky + ho, kx:kx + wo, :])
    patches = jnp.stack(cols, axis=3).reshape(n * ho * wo, k * k * c)
    return patches, (n, ho, wo)


def convtranspose_weight_to_mat(w):
    cin, cout, k, _ = w.shape
    wf = w[:, :, ::-1, ::-1]
    return jnp.transpose(wf, (2, 3, 0, 1)).reshape(k * k * cin, cout)


def _reference_forward(x_nchw, params):
    x = jnp.transpose(x_nchw, (0, 2, 3, 1)).astype(jnp.float32)
    layer_cfg = [(4, 1, 0), (4, 2, 1), (4, 2, 1), (4, 2, 1)]
    for i, (k, s, p) in enumerate(layer_cfg):
        patches, (n, ho, wo) = conv_transpose_patches(x, k, s, p)
        wmat = convtranspose_weight_to_mat(params[f"w{i}"])
        y = patches @ wmat
        if i < 3:
            mean = jnp.mean(y, axis=0, keepdims=True)
            var = jnp.mean((y - mean) ** 2, axis=0, keepdims=True)
            y = params[f"gamma{i}"] * (y - mean) * jax.lax.rsqrt(var + EPS) \
                + params[f"beta{i}"]
            y = jnp.maximum(y, 0.0)
        else:
            y = jnp.tanh(y)
        x = y.reshape(n, ho, wo, wmat.shape[1])
    return jnp.transpose(x, (0, 3, 1, 2))


def init_params(key, nz, ngf, nc):
    """DCGAN-style init: conv ~ N(0, 0.02), BN gamma ~ N(1, 0.02), beta = 0."""
    c = [nz, ngf * 8, ngf * 4, ngf, nc]
    keys = jax.random.split(key, 8)
    params = {}
    for i in range(4):
        params[f"w{i}"] = 0.02 * jax.random.normal(
            keys[i], (c[i], c[i + 1], 4, 4), jnp.float32)
    for i in range(3):  # last layer has no BatchNorm
        params[f"gamma{i}"] = 1.0 + 0.02 * jax.random.normal(
            keys[4 + i], (c[i + 1],), jnp.float32)
        params[f"beta{i}"] = jnp.zeros((c[i + 1],), jnp.float32)
    return params


# ---------------------------------- main ------------------------------------ #

if __name__ == "__main__":
    batch, nz, ngf, nc = 2, 16, 8, 3

    key = jax.random.PRNGKey(0)
    k_x, k_p = jax.random.split(key)
    x = jax.random.normal(k_x, (batch, nz, 1, 1), jnp.float32)
    params = init_params(k_p, nz, ngf, nc)

    consts = prepare_constants(params)                  # one-time weight transform
    fwd = jax.jit(generator_pix_forward, static_argnames=("nc",))
    out = jax.block_until_ready(fwd(x, consts, nc=nc))

    assert out.shape == (batch, nc, 32, 32), out.shape
    assert bool(jnp.all(jnp.isfinite(out)))
    assert bool(jnp.all(jnp.abs(out) <= 1.0 + 1e-6))    # tanh range

    # numerical check vs. the pure-JAX f32 reference (bf16 weights/acts in-kernel)
    ref = _reference_forward(x, params)
    err = float(jnp.max(jnp.abs(out - ref)))
    assert err < 5e-2, f"mismatch vs reference: {err}"

    print("KERNEL_OK")
</pallas_src>

<mosaic_0001>
module attributes {stable_mosaic.version = 11 : i64} {
  func.func @_generator_kernel(%arg0: memref<2x16xf32, #tpu.memory_space<vmem>>, %arg1: memref<16x1024xbf16, #tpu.memory_space<vmem>>, %arg2: memref<256x1024xbf16, #tpu.memory_space<vmem>>, %arg3: memref<256x512xbf16, #tpu.memory_space<vmem>>, %arg4: memref<128x512xbf16, #tpu.memory_space<vmem>>, %arg5: memref<2x64xf32, #tpu.memory_space<vmem>>, %arg6: memref<2x32xf32, #tpu.memory_space<vmem>>, %arg7: memref<2x8xf32, #tpu.memory_space<vmem>>, %arg8: memref<64x128xf32, #tpu.memory_space<vmem>>) attributes {dimension_semantics = [], scalar_prefetch = 0 : i64, scratch_operands = 0 : i64, tpu.core_type = #tpu.core_type<tc>} {
    %c0 = arith.constant 0 : index
    %c0_0 = arith.constant 0 : index
    %0 = vector.load %arg0[%c0, %c0_0] : memref<2x16xf32, #tpu.memory_space<vmem>>, vector<2x16xf32>
    %1 = arith.truncf %0 : vector<2x16xf32> to vector<2x16xbf16>
    %c0_1 = arith.constant 0 : index
    %c0_2 = arith.constant 0 : index
    %2 = vector.load %arg1[%c0_1, %c0_2] : memref<16x1024xbf16, #tpu.memory_space<vmem>>, vector<16x1024xbf16>
    %cst = arith.constant dense<0.000000e+00> : vector<2x1024xf32>
    %3 = tpu.matmul %1, %2, %cst {dimension_numbers = #tpu.dot_dimension_numbers<[1], [0], [0], [1], [0, 0, 1, 1], [], []>} : vector<2x16xbf16>, vector<16x1024xbf16>, vector<2x1024xf32> -> vector<2x1024xf32>
    %4 = vector.extract_strided_slice %3 {offsets = [0, 0], sizes = [1, 256], strides = [1, 1]} : vector<2x1024xf32> to vector<1x256xf32>
    %5 = vector.extract_strided_slice %3 {offsets = [0, 256], sizes = [1, 256], strides = [1, 1]} : vector<2x1024xf32> to vector<1x256xf32>
    %6 = vector.extract_strided_slice %3 {offsets = [0, 512], sizes = [1, 256], strides = [1, 1]} : vector<2x1024xf32> to vector<1x256xf32>
    %7 = vector.extract_strided_slice %3 {offsets = [0, 768], sizes = [1, 256], strides = [1, 1]} : vector<2x1024xf32> to vector<1x256xf32>
    %8 = vector.extract_strided_slice %3 {offsets = [1, 0], sizes = [1, 256], strides = [1, 1]} : vector<2x1024xf32> to vector<1x256xf32>
    %9 = vector.extract_strided_slice %3 {offsets = [1, 256], sizes = [1, 256], strides = [1, 1]} : vector<2x1024xf32> to vector<1x256xf32>
    %10 = vector.extract_strided_slice %3 {offsets = [1, 512], sizes = [1, 256], strides = [1, 1]} : vector<2x1024xf32> to vector<1x256xf32>
    %11 = vector.extract_strided_slice %3 {offsets = [1, 768], sizes = [1, 256], strides = [1, 1]} : vector<2x1024xf32> to vector<1x256xf32>
    %12 = tpu.concatenate %4, %5, %6, %7, %8, %9, %10, %11 in 0 : vector<1x256xf32>, vector<1x256xf32>, vector<1x256xf32>, vector<1x256xf32>, vector<1x256xf32>, vector<1x256xf32>, vector<1x256xf32>, vector<1x256xf32> -> vector<8x256xf32>
    %c0_3 = arith.constant 0 : index
    %c0_4 = arith.constant 0 : index
    %13 = vector.load %arg5[%c0_3, %c0_4] : memref<2x64xf32, #tpu.memory_space<vmem>>, vector<2x64xf32>
    %cst_5 = arith.constant dense<0.000000e+00> : vector<256xf32>
    %14 = vector.multi_reduction <add>, %12, %cst_5 [0] : vector<8x256xf32> to vector<256xf32>
    %15 = vector.shape_cast %14 : vector<256xf32> to vector<1x256xf32>
    %16 = arith.mulf %12, %12 : vector<8x256xf32>
    %cst_6 = arith.constant dense<0.000000e+00> : vector<256xf32>
    %17 = vector.multi_reduction <add>, %16, %cst_6 [0] : vector<8x256xf32> to vector<256xf32>
    %18 = vector.shape_cast %17 : vector<256xf32> to vector<1x256xf32>
    %19 = tpu.concatenate %15, %18 in 0 : vector<1x256xf32>, vector<1x256xf32> -> vector<2x256xf32>
    %20 = vector.extract_strided_slice %19 {offsets = [0, 0], sizes = [2, 64], strides = [1, 1]} : vector<2x256xf32> to vector<2x64xf32>
    %21 = vector.extract_strided_slice %19 {offsets = [0, 64], sizes = [2, 64], strides = [1, 1]} : vector<2x256xf32> to vector<2x64xf32>
    %22 = arith.addf %20, %21 : vector<2x64xf32>
    %23 = vector.extract_strided_slice %19 {offsets = [0, 128], sizes = [2, 64], strides = [1, 1]} : vector<2x256xf32> to vector<2x64xf32>
    %24 = arith.addf %22, %23 : vector<2x64xf32>
    %25 = vector.extract_strided_slice %19 {offsets = [0, 192], sizes = [2, 64], strides = [1, 1]} : vector<2x256xf32> to vector<2x64xf32>
    %26 = arith.addf %24, %25 : vector<2x64xf32>
    %27 = vector.extract_strided_slice %26 {offsets = [0, 0], sizes = [1, 64], strides = [1, 1]} : vector<2x64xf32> to vector<1x64xf32>
    %cst_7 = arith.constant 3.125000e-02 : f32
    %28 = vector.broadcast %cst_7 : f32 to vector<1x64xf32>
    %29 = arith.mulf %27, %28 : vector<1x64xf32>
    %30 = vector.extract_strided_slice %26 {offsets = [1, 0], sizes = [1, 64], strides = [1, 1]} : vector<2x64xf32> to vector<1x64xf32>
    %cst_8 = arith.constant 3.125000e-02 : f32
    %31 = vector.broadcast %cst_8 : f32 to vector<1x64xf32>
    %32 = arith.mulf %30, %31 : vector<1x64xf32>
    %33 = arith.mulf %29, %29 : vector<1x64xf32>
    %34 = arith.subf %32, %33 : vector<1x64xf32>
    %35 = vector.extract_strided_slice %13 {offsets = [0, 0], sizes = [1, 64], strides = [1, 1]} : vector<2x64xf32> to vector<1x64xf32>
    %cst_9 = arith.constant 9.99999974E-6 : f32
    %36 = vector.broadcast %cst_9 : f32 to vector<1x64xf32>
    %37 = arith.addf %34, %36 : vector<1x64xf32>
    %38 = math.rsqrt %37 : vector<1x64xf32>
    %39 = arith.mulf %35, %38 : vector<1x64xf32>
    %40 = vector.extract_strided_slice %13 {offsets = [1, 0], sizes = [1, 64], strides = [1, 1]} : vector<2x64xf32> to vector<1x64xf32>
    %41 = arith.mulf %29, %39 : vector<1x64xf32>
    %42 = arith.subf %40, %41 : vector<1x64xf32>
    %43 = tpu.concatenate %39, %39, %39, %39 in 1 : vector<1x64xf32>, vector<1x64xf32>, vector<1x64xf32>, vector<1x64xf32> -> vector<1x256xf32>
    %44 = tpu.concatenate %42, %42, %42, %42 in 1 : vector<1x64xf32>, vector<1x64xf32>, vector<1x64xf32>, vector<1x64xf32> -> vector<1x256xf32>
    %45 = vector.broadcast %43 : vector<1x256xf32> to vector<8x256xf32>
    %46 = arith.mulf %12, %45 : vector<8x256xf32>
    %47 = vector.broadcast %44 : vector<1x256xf32> to vector<8x256xf32>
    %48 = arith.addf %46, %47 : vector<8x256xf32>
    %cst_10 = arith.constant 0.000000e+00 : f32
    %49 = vector.broadcast %cst_10 : f32 to vector<8x256xf32>
    %50 = arith.maximumf %48, %49 : vector<8x256xf32>
    %51 = arith.truncf %50 : vector<8x256xf32> to vector<8x256xbf16>
    %c0_11 = arith.constant 0 : index
    %c0_12 = arith.constant 0 : index
    %52 = vector.load %arg2[%c0_11, %c0_12] : memref<256x1024xbf16, #tpu.memory_space<vmem>>, vector<256x1024xbf16>
    %cst_13 = arith.constant dense<0.000000e+00> : vector<8x1024xf32>
    %53 = tpu.matmul %51, %52, %cst_13 {dimension_numbers = #tpu.dot_dimension_numbers<[1], [0], [0], [1], [0, 0, 1, 1], [], []>} : vector<8x256xbf16>, vector<256x1024xbf16>, vector<8x1024xf32> -> vector<8x1024xf32>
    %cst_14 = arith.constant 0.000000e+00 : f32
    %54 = vector.broadcast %cst_14 : f32 to vector<1x256xf32>
    %55 = vector.extract_strided_slice %53 {offsets = [0, 0], sizes = [4, 256], strides = [1, 1]} : vector<8x1024xf32> to vector<4x256xf32>
    %56 = vector.extract_strided_slice %53 {offsets = [0, 256], sizes = [4, 256], strides = [1, 1]} : vector<8x1024xf32> to vector<4x256xf32>
    %57 = vector.extract_strided_slice %53 {offsets = [0, 512], sizes = [4, 256], strides = [1, 1]} : vector<8x1024xf32> to vector<4x256xf32>
    %58 = vector.extract_strided_slice %53 {offsets = [0, 768], sizes = [4, 256], strides = [1, 1]} : vector<8x1024xf32> to vector<4x256xf32>
    %59 = vector.extract_strided_slice %58 {offsets = [0, 0], sizes = [3, 256], strides = [1, 1]} : vector<4x256xf32> to vector<3x256xf32>
    %60 = tpu.concatenate %54, %59 in 0 : vector<1x256xf32>, vector<3x256xf32> -> vector<4x256xf32>
    %61 = arith.addf %56, %60 : vector<4x256xf32>
    %62 = vector.extract_strided_slice %55 {offsets = [1, 0], sizes = [3, 256], strides = [1, 1]} : vector<4x256xf32> to vector<3x256xf32>
    %63 = tpu.concatenate %62, %54 in 0 : vector<3x256xf32>, vector<1x256xf32> -> vector<4x256xf32>
    %64 = arith.addf %57, %63 : vector<4x256xf32>
    %65 = vector.extract_strided_slice %61 {offsets = [0, 0], sizes = [1, 256], strides = [1, 1]} : vector<4x256xf32> to vector<1x256xf32>
    %66 = vector.extract_strided_slice %64 {offsets = [0, 0], sizes = [1, 256], strides = [1, 1]} : vector<4x256xf32> to vector<1x256xf32>
    %67 = vector.extract_strided_slice %61 {offsets = [1, 0], sizes = [1, 256], strides = [1, 1]} : vector<4x256xf32> to vector<1x256xf32>
    %68 = vector.extract_strided_slice %64 {offsets = [1, 0], sizes = [1, 256], strides = [1, 1]} : vector<4x256xf32> to vector<1x256xf32>
    %69 = vector.extract_strided_slice %61 {offsets = [2, 0], sizes = [1, 256], strides = [1, 1]} : vector<4x256xf32> to vector<1x256xf32>
    %70 = vector.extract_strided_slice %64 {offsets = [2, 0], sizes = [1, 256], strides = [1, 1]} : vector<4x256xf32> to vector<1x256xf32>
    %71 = vector.extract_strided_slice %61 {offsets = [3, 0], sizes = [1, 256], strides = [1, 1]} : vector<4x256xf32> to vector<1x256xf32>
    %72 = vector.extract_strided_slice %64 {offsets = [3, 0], sizes = [1, 256], strides = [1, 1]} : vector<4x256xf32> to vector<1x256xf32>
    %73 = vector.extract_strided_slice %53 {offsets = [4, 0], sizes = [4, 256], strides = [1, 1]} : vector<8x1024xf32> to vector<4x256xf32>
    %74 = vector.extract_strided_slice %53 {offsets = [4, 256], sizes = [4, 256], strides = [1, 1]} : vector<8x1024xf32> to vector<4x256xf32>
    %75 = vector.extract_strided_slice %53 {offsets = [4, 512], sizes = [4, 256], strides = [1, 1]} : vector<8x1024xf32> to vector<4x256xf32>
    %76 = vector.extract_strided_slice %53 {offsets = [4, 768], sizes = [4, 256], strides = [1, 1]} : vector<8x1024xf32> to vector<4x256xf32>
    %77 = vector.extract_strided_slice %76 {offsets = [0, 0], sizes = [3, 256], strides = [1, 1]} : vector<4x256xf32> to vector<3x256xf32>
    %78 = tpu.concatenate %54, %77 in 0 : vector<1x256xf32>, vector<3x256xf32> -> vector<4x256xf32>
    %79 = arith.addf %74, %78 : vector<4x256xf32>
    %80 = vector.extract_strided_slice %73 {offsets = [1, 0], sizes = [3, 256], strides = [1, 1]} : vector<4x256xf32> to vector<3x256xf32>
    %81 = tpu.concatenate %80, %54 in 0 : vector<3x256xf32>, vector<1x256xf32> -> vector<4x256xf32>
    %82 = arith.addf %75, %81 : vector<4x256xf32>
    %83 = vector.extract_strided_slice %79 {offsets = [0, 0], sizes = [1, 256], strides = [1, 1]} : vector<4x256xf32> to vector<1x256xf32>
    %84 = vector.extract_strided_slice %82 {offsets = [0, 0], sizes = [1, 256], strides = [1, 1]} : vector<4x256xf32> to vector<1x256xf32>
    %85 = vector.extract_strided_slice %79 {offsets = [1, 0], sizes = [1, 256], strides = [1, 1]} : vector<4x256xf32> to vector<1x256xf32>
    %86 = vector.extract_strided_slice %82 {offsets = [1, 0], sizes = [1, 256], strides = [1, 1]} : vector<4x256xf32> to vector<1x256xf32>
    %87 = vector.extract_strided_slice %79 {offsets = [2, 0], sizes = [1, 256], strides = [1, 1]} : vector<4x256xf32> to vector<1x256xf32>
    %88 = vector.extract_strided_slice %82 {offsets = [2, 0], sizes = [1, 256], strides = [1, 1]} : vector<4x256xf32> to vector<1x256xf32>
    %89 = vector.extract_strided_slice %79 {offsets = [3, 0], sizes = [1, 256], strides = [1, 1]} : vector<4x256xf32> to vector<1x256xf32>
    %90 = vector.extract_strided_slice %82 {offsets = [3, 0], sizes = [1, 256], strides = [1, 1]} : vector<4x256xf32> to vector<1x256xf32>
    %91 = tpu.concatenate %65, %66, %67, %68, %69, %70, %71, %72, %83, %84, %85, %86, %87, %88, %89, %90 in 0 : vector<1x256xf32>, vector<1x256xf32>, vector<1x256xf32>, vector<1x256xf32>, vector<1x256xf32>, vector<1x256xf32>, vector<1x256xf32>, vector<1x256xf32>, vector<1x256xf32>, vector<1x256xf32>, vector<1x256xf32>, vector<1x256xf32>, vector<1x256xf32>, vector<1x256xf32>, vector<1x256xf32>, vector<1x256xf32> -> vector<16x256xf32>
    %c0_15 = arith.constant 0 : index
    %c0_16 = arith.constant 0 : index
    %92 = vector.load %arg6[%c0_15, %c0_16] : memref<2x32xf32, #tpu.memory_space<vmem>>, vector<2x32xf32>
    %cst_17 = arith.constant dense<0.000000e+00> : vector<256xf32>
    %93 = vector.multi_reduction <add>, %91, %cst_17 [0] : vector<16x256xf32> to vector<256xf32>
    %94 = vector.shape_cast %93 : vector<256xf32> to vector<1x256xf32>
    %95 = arith.mulf %91, %91 : vector<16x256xf32>
    %cst_18 = arith.constant dense<0.000000e+00> : vector<256xf32>
    %96 = vector.multi_reduction <add>, %95, %cst_18 [0] : vector<16x256xf32> to vector<256xf32>
    %97 = vector.shape_cast %96 : vector<256xf32> to vector<1x256xf32>
    %98 = tpu.concatenate %94, %97 in 0 : vector<1x256xf32>, vector<1x256xf32> -> vector<2x256xf32>
    %99 = vector.extract_strided_slice %98 {offsets = [0, 0], sizes = [2, 32], strides = [1, 1]} : vector<2x256xf32> to vector<2x32xf32>
    %100 = vector.extract_strided_slice %98 {offsets = [0, 32], sizes = [2, 32], strides = [1, 1]} : vector<2x256xf32> to vector<2x32xf32>
    %101 = arith.addf %99, %100 : vector<2x32xf32>
    %102 = vector.extract_strided_slice %98 {offsets = [0, 64], sizes = [2, 32], strides = [1, 1]} : vector<2x256xf32> to vector<2x32xf32>
    %103 = arith.addf %101, %102 : vector<2x32xf32>
    %104 = vector.extract_strided_slice %98 {offsets = [0, 96], sizes = [2, 32], strides = [1, 1]} : vector<2x256xf32> to vector<2x32xf32>
    %105 = arith.addf %103, %104 : vector<2x32xf32>
    %106 = vector.extract_strided_slice %98 {offsets = [0, 128], sizes = [2, 32], strides = [1, 1]} : vector<2x256xf32> to vector<2x32xf32>
    %107 = arith.addf %105, %106 : vector<2x32xf32>
    %108 = vector.extract_strided_slice %98 {offsets = [0, 160], sizes = [2, 32], strides = [1, 1]} : vector<2x256xf32> to vector<2x32xf32>
    %109 = arith.addf %107, %108 : vector<2x32xf32>
    %110 = vector.extract_strided_slice %98 {offsets = [0, 192], sizes = [2, 32], strides = [1, 1]} : vector<2x256xf32> to vector<2x32xf32>
    %111 = arith.addf %109, %110 : vector<2x32xf32>
    %112 = vector.extract_strided_slice %98 {offsets = [0, 224], sizes = [2, 32], strides = [1, 1]} : vector<2x256xf32> to vector<2x32xf32>
    %113 = arith.addf %111, %112 : vector<2x32xf32>
    %114 = vector.extract_strided_slice %113 {offsets = [0, 0], sizes = [1, 32], strides = [1, 1]} : vector<2x32xf32> to vector<1x32xf32>
    %cst_19 = arith.constant 7.812500e-03 : f32
    %115 = vector.broadcast %cst_19 : f32 to vector<1x32xf32>
    %116 = arith.mulf %114, %115 : vector<1x32xf32>
    %117 = vector.extract_strided_slice %113 {offsets = [1, 0], sizes = [1, 32], strides = [1, 1]} : vector<2x32xf32> to vector<1x32xf32>
    %cst_20 = arith.constant 7.812500e-03 : f32
    %118 = vector.broadcast %cst_20 : f32 to vector<1x32xf32>
    %119 = arith.mulf %117, %118 : vector<1x32xf32>
    %120 = arith.mulf %116, %116 : vector<1x32xf32>
    %121 = arith.subf %119, %120 : vector<1x32xf32>
    %122 = vector.extract_strided_slice %92 {offsets = [0, 0], sizes = [1, 32], strides = [1, 1]} : vector<2x32xf32> to vector<1x32xf32>
    %cst_21 = arith.constant 9.99999974E-6 : f32
    %123 = vector.broadcast %cst_21 : f32 to vector<1x32xf32>
    %124 = arith.addf %121, %123 : vector<1x32xf32>
    %125 = math.rsqrt %124 : vector<1x32xf32>
    %126 = arith.mulf %122, %125 : vector<1x32xf32>
    %127 = vector.extract_strided_slice %92 {offsets = [1, 0], sizes = [1, 32], strides = [1, 1]} : vector<2x32xf32> to vector<1x32xf32>
    %128 = arith.mulf %116, %126 : vector<1x32xf32>
    %129 = arith.subf %127, %128 : vector<1x32xf32>
    %130 = tpu.concatenate %126, %126, %126, %126, %126, %126, %126, %126 in 1 : vector<1x32xf32>, vector<1x32xf32>, vector<1x32xf32>, vector<1x32xf32>, vector<1x32xf32>, vector<1x32xf32>, vector<1x32xf32>, vector<1x32xf32> -> vector<1x256xf32>
    %131 = tpu.concatenate %129, %129, %129, %129, %129, %129, %129, %129 in 1 : vector<1x32xf32>, vector<1x32xf32>, vector<1x32xf32>, vector<1x32xf32>, vector<1x32xf32>, vector<1x32xf32>, vector<1x32xf32>, vector<1x32xf32> -> vector<1x256xf32>
    %132 = vector.broadcast %130 : vector<1x256xf32> to vector<16x256xf32>
    %133 = arith.mulf %91, %132 : vector<16x256xf32>
    %134 = vector.broadcast %131 : vector<1x256xf32> to vector<16x256xf32>
    %135 = arith.addf %133, %134 : vector<16x256xf32>
    %cst_22 = arith.constant 0.000000e+00 : f32
    %136 = vector.broadcast %cst_22 : f32 to vector<16x256xf32>
    %137 = arith.maximumf %135, %136 : vector<16x256xf32>
    %138 = arith.truncf %137 : vector<16x256xf32> to vector<16x256xbf16>
    %c0_23 = arith.constant 0 : index
    %c0_24 = arith.constant 0 : index
    %139 = vector.load %arg3[%c0_23, %c0_24] : memref<256x512xbf16, #tpu.memory_space<vmem>>, vector<256x512xbf16>
    %cst_25 = arith.constant dense<0.000000e+00> : vector<16x512xf32>
    %140 = tpu.matmul %138, %139, %cst_25 {dimension_numbers = #tpu.dot_dimension_numbers<[1], [0], [0], [1], [0, 0, 1, 1], [], []>} : vector<16x256xbf16>, vector<256x512xbf16>, vector<16x512xf32> -> vector<16x512xf32>
    %cst_26 = arith.constant 0.000000e+00 : f32
    %141 = vector.broadcast %cst_26 : f32 to vector<1x128xf32>
    %142 = vector.extract_strided_slice %140 {offsets = [0, 0], sizes = [8, 128], strides = [1, 1]} : vector<16x512xf32> to vector<8x128xf32>
    %143 = vector.extract_strided_slice %140 {offsets = [0, 128], sizes = [8, 128], strides = [1, 1]} : vector<16x512xf32> to vector<8x128xf32>
    %144 = vector.extract_strided_slice %140 {offsets = [0, 256], sizes = [8, 128], strides = [1, 1]} : vector<16x512xf32> to vector<8x128xf32>
    %145 = vector.extract_strided_slice %140 {offsets = [0, 384], sizes = [8, 128], strides = [1, 1]} : vector<16x512xf32> to vector<8x128xf32>
    %146 = vector.extract_strided_slice %145 {offsets = [0, 0], sizes = [7, 128], strides = [1, 1]} : vector<8x128xf32> to vector<7x128xf32>
    %147 = tpu.concatenate %141, %146 in 0 : vector<1x128xf32>, vector<7x128xf32> -> vector<8x128xf32>
    %148 = arith.addf %143, %147 : vector<8x128xf32>
    %149 = vector.extract_strided_slice %142 {offsets = [1, 0], sizes = [7, 128], strides = [1, 1]} : vector<8x128xf32> to vector<7x128xf32>
    %150 = tpu.concatenate %149, %141 in 0 : vector<7x128xf32>, vector<1x128xf32> -> vector<8x128xf32>
    %151 = arith.addf %144, %150 : vector<8x128xf32>
    %152 = vector.extract_strided_slice %148 {offsets = [0, 0], sizes = [1, 128], strides = [1, 1]} : vector<8x128xf32> to vector<1x128xf32>
    %153 = vector.extract_strided_slice %151 {offsets = [0, 0], sizes = [1, 128], strides = [1, 1]} : vector<8x128xf32> to vector<1x128xf32>
    %154 = vector.extract_strided_slice %148 {offsets = [1, 0], sizes = [1, 128], strides = [1, 1]} : vector<8x128xf32> to vector<1x128xf32>
    %155 = vector.extract_strided_slice %151 {offsets = [1, 0], sizes = [1, 128], strides = [1, 1]} : vector<8x128xf32> to vector<1x128xf32>
    %156 = vector.extract_strided_slice %148 {offsets = [2, 0], sizes = [1, 128], strides = [1, 1]} : vector<8x128xf32> to vector<1x128xf32>
    %157 = vector.extract_strided_slice %151 {offsets = [2, 0], sizes = [1, 128], strides = [1, 1]} : vector<8x128xf32> to vector<1x128xf32>
    %158 = vector.extract_strided_slice %148 {offsets = [3, 0], sizes = [1, 128], strides = [1, 1]} : vector<8x128xf32> to vector<1x128xf32>
    %159 = vector.extract_strided_slice %151 {offsets = [3, 0], sizes = [1, 128], strides = [1, 1]} : vector<8x128xf32> to vector<1x128xf32>
    %160 = vector.extract_strided_slice %148 {offsets = [4, 0], sizes = [1, 128], strides = [1, 1]} : vector<8x128xf32> to vector<1x128xf32>
    %161 = vector.extract_strided_slice %151 {offsets = [4, 0], sizes = [1, 128], strides = [1, 1]} : vector<8x128xf32> to vector<1x128xf32>
    %162 = vector.extract_strided_slice %148 {offsets = [5, 0], sizes = [1, 128], strides = [1, 1]} : vector<8x128xf32> to vector<1x128xf32>
    %163 = vector.extract_strided_slice %151 {offsets = [5, 0], sizes = [1, 128], strides = [1, 1]} : vector<8x128xf32> to vector<1x128xf32>
    %164 = vector.extract_strided_slice %148 {offsets = [6, 0], sizes = [1, 128], strides = [1, 1]} : vector<8x128xf32> to vector<1x128xf32>
    %165 = vector.extract_strided_slice %151 {offsets = [6, 0], sizes = [1, 128], strides = [1, 1]} : vector<8x128xf32> to vector<1x128xf32>
    %166 = vector.extract_strided_slice %148 {offsets = [7, 0], sizes = [1, 128], strides = [1, 1]} : vector<8x128xf32> to vector<1x128xf32>
    %167 = vector.extract_strided_slice %151 {offsets = [7, 0], sizes = [1, 128], strides = [1, 1]} : vector<8x128xf32> to vector<1x128xf32>
    %168 = vector.extract_strided_slice %140 {offsets = [8, 0], sizes = [8, 128], strides = [1, 1]} : vector<16x512xf32> to vector<8x128xf32>
    %169 = vector.extract_strided_slice %140 {offsets = [8, 128], sizes = [8, 128], strides = [1, 1]} : vector<16x512xf32> to vector<8x128xf32>
    %170 = vector.extract_strided_slice %140 {offsets = [8, 256], sizes = [8, 128], strides = [1, 1]} : vector<16x512xf32> to vector<8x128xf32>
    %171 = vector.extract_strided_slice %140 {offsets = [8, 384], sizes = [8, 128], strides = [1, 1]} : vector<16x512xf32> to vector<8x128xf32>
    %172 = vector.extract_strided_slice %171 {offsets = [0, 0], sizes = [7, 128], strides = [1, 1]} : vector<8x128xf32> to vector<7x128xf32>
    %173 = tpu.concatenate %141, %172 in 0 : vector<1x128xf32>, vector<7x128xf32> -> vector<8x128xf32>
    %174 = arith.addf %169, %173 : vector<8x128xf32>
    %175 = vector.extract_strided_slice %168 {offsets = [1, 0], sizes = [7, 128], strides = [1, 1]} : vector<8x128xf32> to vector<7x128xf32>
    %176 = tpu.concatenate %175, %141 in 0 : vector<7x128xf32>, vector<1x128xf32> -> vector<8x128xf32>
    %177 = arith.addf %170, %176 : vector<8x128xf32>
    %178 = vector.extract_strided_slice %174 {offsets = [0, 0], sizes = [1, 128], strides = [1, 1]} : vector<8x128xf32> to vector<1x128xf32>
    %179 = vector.extract_strided_slice %177 {offsets = [0, 0], sizes = [1, 128], strides = [1, 1]} : vector<8x128xf32> to vector<1x128xf32>
    %180 = vector.extract_strided_slice %174 {offsets = [1, 0], sizes = [1, 128], strides = [1, 1]} : vector<8x128xf32> to vector<1x128xf32>
    %181 = vector.extract_strided_slice %177 {offsets = [1, 0], sizes = [1, 128], strides = [1, 1]} : vector<8x128xf32> to vector<1x128xf32>
    %182 = vector.extract_strided_slice %174 {offsets = [2, 0], sizes = [1, 128], strides = [1, 1]} : vector<8x128xf32> to vector<1x128xf32>
    %183 = vector.extract_strided_slice %177 {offsets = [2, 0], sizes = [1, 128], strides = [1, 1]} : vector<8x128xf32> to vector<1x128xf32>
    %184 = vector.extract_strided_slice %174 {offsets = [3, 0], sizes = [1, 128], strides = [1, 1]} : vector<8x128xf32> to vector<1x128xf32>
    %185 = vector.extract_strided_slice %177 {offsets = [3, 0], sizes = [1, 128], strides = [1, 1]} : vector<8x128xf32> to vector<1x128xf32>
    %186 = vector.extract_strided_slice %174 {offsets = [4, 0], sizes = [1, 128], strides = [1, 1]} : vector<8x128xf32> to vector<1x128xf32>
    %187 = vector.extract_strided_slice %177 {offsets = [4, 0], sizes = [1, 128], strides = [1, 1]} : vector<8x128xf32> to vector<1x128xf32>
    %188 = vector.extract_strided_slice %174 {offsets = [5, 0], sizes = [1, 128], strides = [1, 1]} : vector<8x128xf32> to vector<1x128xf32>
    %189 = vector.extract_strided_slice %177 {offsets = [5, 0], sizes = [1, 128], strides = [1, 1]} : vector<8x128xf32> to vector<1x128xf32>
    %190 = vector.extract_strided_slice %174 {offsets = [6, 0], sizes = [1, 128], strides = [1, 1]} : vector<8x128xf32> to vector<1x128xf32>
    %191 = vector.extract_strided_slice %177 {offsets = [6, 0], sizes = [1, 128], strides = [1, 1]} : vector<8x128xf32> to vector<1x128xf32>
    %192 = vector.extract_strided_slice %174 {offsets = [7, 0], sizes = [1, 128], strides = [1, 1]} : vector<8x128xf32> to vector<1x128xf32>
    %193 = vector.extract_strided_slice %177 {offsets = [7, 0], sizes = [1, 128], strides = [1, 1]} : vector<8x128xf32> to vector<1x128xf32>
    %194 = tpu.concatenate %152, %153, %154, %155, %156, %157, %158, %159, %160, %161, %162, %163, %164, %165, %166, %167 in 0 : vector<1x128xf32>, vector<1x128xf32>, vector<1x128xf32>, vector<1x128xf32>, vector<1x128xf32>, vector<1x128xf32>, vector<1x128xf32>, vector<1x128xf32>, vector<1x128xf32>, vector<1x128xf32>, vector<1x128xf32>, vector<1x128xf32>, vector<1x128xf32>, vector<1x128xf32>, vector<1x128xf32>, vector<1x128xf32> -> vector<16x128xf32>
    %195 = tpu.concatenate %178, %179, %180, %181, %182, %183, %184, %185, %186, %187, %188, %189, %190, %191, %192, %193 in 0 : vector<1x128xf32>, vector<1x128xf32>, vector<1x128xf32>, vector<1x128xf32>, vector<1x128xf32>, vector<1x128xf32>, vector<1x128xf32>, vector<1x128xf32>, vector<1x128xf32>, vector<1x128xf32>, vector<1x128xf32>, vector<1x128xf32>, vector<1x128xf32>, vector<1x128xf32>, vector<1x128xf32>, vector<1x128xf32> -> vector<16x128xf32>
    %196 = tpu.concatenate %194, %195 in 0 : vector<16x128xf32>, vector<16x128xf32> -> vector<32x128xf32>
    %c0_27 = arith.constant 0 : index
    %c0_28 = arith.constant 0 : index
    %197 = vector.load %arg7[%c0_27, %c0_28] : memref<2x8xf32, #tpu.memory_space<vmem>>, vector<2x8xf32>
    %cst_29 = arith.constant dense<0.000000e+00> : vector<128xf32>
    %198 = vector.multi_reduction <add>, %196, %cst_29 [0] : vector<32x128xf32> to vector<128xf32>
    %199 = vector.shape_cast %198 : vector<128xf32> to vector<1x128xf32>
    %200 = arith.mulf %196, %196 : vector<32x128xf32>
    %cst_30 = arith.constant dense<0.000000e+00> : vector<128xf32>
    %201 = vector.multi_reduction <add>, %200, %cst_30 [0] : vector<32x128xf32> to vector<128xf32>
    %202 = vector.shape_cast %201 : vector<128xf32> to vector<1x128xf32>
    %203 = tpu.concatenate %199, %202 in 0 : vector<1x128xf32>, vector<1x128xf32> -> vector<2x128xf32>
    %204 = vector.extract_strided_slice %203 {offsets = [0, 0], sizes = [2, 8], strides = [1, 1]} : vector<2x128xf32> to vector<2x8xf32>
    %205 = vector.extract_strided_slice %203 {offsets = [0, 8], sizes = [2, 8], strides = [1, 1]} : vector<2x128xf32> to vector<2x8xf32>
    %206 = arith.addf %204, %205 : vector<2x8xf32>
    %207 = vector.extract_strided_slice %203 {offsets = [0, 16], sizes = [2, 8], strides = [1, 1]} : vector<2x128xf32> to vector<2x8xf32>
    %208 = arith.addf %206, %207 : vector<2x8xf32>
    %209 = vector.extract_strided_slice %203 {offsets = [0, 24], sizes = [2, 8], strides = [1, 1]} : vector<2x128xf32> to vector<2x8xf32>
    %210 = arith.addf %208, %209 : vector<2x8xf32>
    %211 = vector.extract_strided_slice %203 {offsets = [0, 32], sizes = [2, 8], strides = [1, 1]} : vector<2x128xf32> to vector<2x8xf32>
    %212 = arith.addf %210, %211 : vector<2x8xf32>
    %213 = vector.extract_strided_slice %203 {offsets = [0, 40], sizes = [2, 8], strides = [1, 1]} : vector<2x128xf32> to vector<2x8xf32>
    %214 = arith.addf %212, %213 : vector<2x8xf32>
    %215 = vector.extract_strided_slice %203 {offsets = [0, 48], sizes = [2, 8], strides = [1, 1]} : vector<2x128xf32> to vector<2x8xf32>
    %216 = arith.addf %214, %215 : vector<2x8xf32>
    %217 = vector.extract_strided_slice %203 {offsets = [0, 56], sizes = [2, 8], strides = [1, 1]} : vector<2x128xf32> to vector<2x8xf32>
    %218 = arith.addf %216, %217 : vector<2x8xf32>
    %219 = vector.extract_strided_slice %203 {offsets = [0, 64], sizes = [2, 8], strides = [1, 1]} : vector<2x128xf32> to vector<2x8xf32>
    %220 = arith.addf %218, %219 : vector<2x8xf32>
    %221 = vector.extract_strided_slice %203 {offsets = [0, 72], sizes = [2, 8], strides = [1, 1]} : vector<2x128xf32> to vector<2x8xf32>
    %222 = arith.addf %220, %221 : vector<2x8xf32>
    %223 = vector.extract_strided_slice %203 {offsets = [0, 80], sizes = [2, 8], strides = [1, 1]} : vector<2x128xf32> to vector<2x8xf32>
    %224 = arith.addf %222, %223 : vector<2x8xf32>
    %225 = vector.extract_strided_slice %203 {offsets = [0, 88], sizes = [2, 8], strides = [1, 1]} : vector<2x128xf32> to vector<2x8xf32>
    %226 = arith.addf %224, %225 : vector<2x8xf32>
    %227 = vector.extract_strided_slice %203 {offsets = [0, 96], sizes = [2, 8], strides = [1, 1]} : vector<2x128xf32> to vector<2x8xf32>
    %228 = arith.addf %226, %227 : vector<2x8xf32>
    %229 = vector.extract_strided_slice %203 {offsets = [0, 104], sizes = [2, 8], strides = [1, 1]} : vector<2x128xf32> to vector<2x8xf32>
    %230 = arith.addf %228, %229 : vector<2x8xf32>
    %231 = vector.extract_strided_slice %203 {offsets = [0, 112], sizes = [2, 8], strides = [1, 1]} : vector<2x128xf32> to vector<2x8xf32>
    %232 = arith.addf %230, %231 : vector<2x8xf32>
    %233 = vector.extract_strided_slice %203 {offsets = [0, 120], sizes = [2, 8], strides = [1, 1]} : vector<2x128xf32> to vector<2x8xf32>
    %234 = arith.addf %232, %233 : vector<2x8xf32>
    %235 = vector.extract_strided_slice %234 {offsets = [0, 0], sizes = [1, 8], strides = [1, 1]} : vector<2x8xf32> to vector<1x8xf32>
    %cst_31 = arith.constant 0.001953125 : f32
    %236 = vector.broadcast %cst_31 : f32 to vector<1x8xf32>
    %237 = arith.mulf %235, %236 : vector<1x8xf32>
    %238 = vector.extract_strided_slice %234 {offsets = [1, 0], sizes = [1, 8], strides = [1, 1]} : vector<2x8xf32> to vector<1x8xf32>
    %cst_32 = arith.constant 0.001953125 : f32
    %239 = vector.broadcast %cst_32 : f32 to vector<1x8xf32>
    %240 = arith.mulf %238, %239 : vector<1x8xf32>
    %241 = arith.mulf %237, %237 : vector<1x8xf32>
    %242 = arith.subf %240, %241 : vector<1x8xf32>
    %243 = vector.extract_strided_slice %197 {offsets = [0, 0], sizes = [1, 8], strides = [1, 1]} : vector<2x8xf32> to vector<1x8xf32>
    %cst_33 = arith.constant 9.99999974E-6 : f32
    %244 = vector.broadcast %cst_33 : f32 to vector<1x8xf32>
    %245 = arith.addf %242, %244 : vector<1x8xf32>
    %246 = math.rsqrt %245 : vector<1x8xf32>
    %247 = arith.mulf %243, %246 : vector<1x8xf32>
    %248 = vector.extract_strided_slice %197 {offsets = [1, 0], sizes = [1, 8], strides = [1, 1]} : vector<2x8xf32> to vector<1x8xf32>
    %249 = arith.mulf %237, %247 : vector<1x8xf32>
    %250 = arith.subf %248, %249 : vector<1x8xf32>
    %251 = tpu.concatenate %247, %247, %247, %247, %247, %247, %247, %247, %247, %247, %247, %247, %247, %247, %247, %247 in 1 : vector<1x8xf32>, vector<1x8xf32>, vector<1x8xf32>, vector<1x8xf32>, vector<1x8xf32>, vector<1x8xf32>, vector<1x8xf32>, vector<1x8xf32>, vector<1x8xf32>, vector<1x8xf32>, vector<1x8xf32>, vector<1x8xf32>, vector<1x8xf32>, vector<1x8xf32>, vector<1x8xf32>, vector<1x8xf32> -> vector<1x128xf32>
    %252 = tpu.concatenate %250, %250, %250, %250, %250, %250, %250, %250, %250, %250, %250, %250, %250, %250, %250, %250 in 1 : vector<1x8xf32>, vector<1x8xf32>, vector<1x8xf32>, vector<1x8xf32>, vector<1x8xf32>, vector<1x8xf32>, vector<1x8xf32>, vector<1x8xf32>, vector<1x8xf32>, vector<1x8xf32>, vector<1x8xf32>, vector<1x8xf32>, vector<1x8xf32>, vector<1x8xf32>, vector<1x8xf32>, vector<1x8xf32> -> vector<1x128xf32>
    %253 = vector.broadcast %251 : vector<1x128xf32> to vector<32x128xf32>
    %254 = arith.mulf %196, %253 : vector<32x128xf32>
    %255 = vector.broadcast %252 : vector<1x128xf32> to vector<32x128xf32>
    %256 = arith.addf %254, %255 : vector<32x128xf32>
    %cst_34 = arith.constant 0.000000e+00 : f32
    %257 = vector.broadcast %cst_34 : f32 to vector<32x128xf32>
    %258 = arith.maximumf %256, %257 : vector<32x128xf32>
    %259 = arith.truncf %258 : vector<32x128xf32> to vector<32x128xbf16>
    %c0_35 = arith.constant 0 : index
    %c0_36 = arith.constant 0 : index
    %260 = vector.load %arg4[%c0_35, %c0_36] : memref<128x512xbf16, #tpu.memory_space<vmem>>, vector<128x512xbf16>
    %cst_37 = arith.constant dense<0.000000e+00> : vector<32x512xf32>
    %261 = tpu.matmul %259, %260, %cst_37 {dimension_numbers = #tpu.dot_dimension_numbers<[1], [0], [0], [1], [0, 0, 1, 1], [], []>} : vector<32x128xbf16>, vector<128x512xbf16>, vector<32x512xf32> -> vector<32x512xf32>
    %cst_38 = arith.constant 0.000000e+00 : f32
    %262 = vector.broadcast %cst_38 : f32 to vector<1x128xf32>
    %263 = vector.extract_strided_slice %261 {offsets = [0, 0], sizes = [16, 128], strides = [1, 1]} : vector<32x512xf32> to vector<16x128xf32>
    %264 = vector.extract_strided_slice %261 {offsets = [0, 128], sizes = [16, 128], strides = [1, 1]} : vector<32x512xf32> to vector<16x128xf32>
    %265 = vector.extract_strided_slice %261 {offsets = [0, 256], sizes = [16, 128], strides = [1, 1]} : vector<32x512xf32> to vector<16x128xf32>
    %266 = vector.extract_strided_slice %261 {offsets = [0, 384], sizes = [16, 128], strides = [1, 1]} : vector<32x512xf32> to vector<16x128xf32>
    %267 = vector.extract_strided_slice %266 {offsets = [0, 0], sizes = [15, 128], strides = [1, 1]} : vector<16x128xf32> to vector<15x128xf32>
    %268 = tpu.concatenate %262, %267 in 0 : vector<1x128xf32>, vector<15x128xf32> -> vector<16x128xf32>
    %269 = arith.addf %264, %268 : vector<16x128xf32>
    %270 = vector.extract_strided_slice %263 {offsets = [1, 0], sizes = [15, 128], strides = [1, 1]} : vector<16x128xf32> to vector<15x128xf32>
    %271 = tpu.concatenate %270, %262 in 0 : vector<15x128xf32>, vector<1x128xf32> -> vector<16x128xf32>
    %272 = arith.addf %265, %271 : vector<16x128xf32>
    %273 = vector.extract_strided_slice %261 {offsets = [16, 0], sizes = [16, 128], strides = [1, 1]} : vector<32x512xf32> to vector<16x128xf32>
    %274 = vector.extract_strided_slice %261 {offsets = [16, 128], sizes = [16, 128], strides = [1, 1]} : vector<32x512xf32> to vector<16x128xf32>
    %275 = vector.extract_strided_slice %261 {offsets = [16, 256], sizes = [16, 128], strides = [1, 1]} : vector<32x512xf32> to vector<16x128xf32>
    %276 = vector.extract_strided_slice %261 {offsets = [16, 384], sizes = [16, 128], strides = [1, 1]} : vector<32x512xf32> to vector<16x128xf32>
    %277 = vector.extract_strided_slice %276 {offsets = [0, 0], sizes = [15, 128], strides = [1, 1]} : vector<16x128xf32> to vector<15x128xf32>
    %278 = tpu.concatenate %262, %277 in 0 : vector<1x128xf32>, vector<15x128xf32> -> vector<16x128xf32>
    %279 = arith.addf %274, %278 : vector<16x128xf32>
    %280 = vector.extract_strided_slice %273 {offsets = [1, 0], sizes = [15, 128], strides = [1, 1]} : vector<16x128xf32> to vector<15x128xf32>
    %281 = tpu.concatenate %280, %262 in 0 : vector<15x128xf32>, vector<1x128xf32> -> vector<16x128xf32>
    %282 = arith.addf %275, %281 : vector<16x128xf32>
    %283 = tpu.concatenate %269, %272, %279, %282 in 0 : vector<16x128xf32>, vector<16x128xf32>, vector<16x128xf32>, vector<16x128xf32> -> vector<64x128xf32>
    %284 = math.tanh %283 : vector<64x128xf32>
    %c0_39 = arith.constant 0 : index
    %c0_40 = arith.constant 0 : index
    %285 = vector.load %arg8[%c0_39, %c0_40] : memref<64x128xf32, #tpu.memory_space<vmem>>, vector<64x128xf32>
    tpu.vector_store %arg8[%c0_39, %c0_40], %284 {strides = array<i32>} : memref<64x128xf32, #tpu.memory_space<vmem>>, vector<64x128xf32>,
    return
  }
}

</mosaic_0001>

<llo_original>
// kernel: generator_pix_forward.1
$region0: #{generator_pix_forward.1}
  #allocation0 [shape = 'u32[]', space=smem, size = 0x4, offset = 0x4, fixed_abs, tag = 'smem constant byte address 0x4 - core index']
  #allocation1 [shape = 'u32[144,128]{1,0:T(1,128)}', space=vmem, size = 0x12000, scoped, tag = 'internal scratch']
  %s0 = inlined_call_operand.vmem [shape: f32[2,16], index: 0, kind: input, shape index: {}]
  %s1 = inlined_call_operand.hbm [shape: bf16[16,1024], index: 1, kind: input, shape index: {}]
  %s2 = inlined_call_operand.hbm [shape: bf16[256,1024], index: 2, kind: input, shape index: {}]
  %s3 = inlined_call_operand.hbm [shape: bf16[256,512], index: 3, kind: input, shape index: {}]
  %s4 = inlined_call_operand.hbm [shape: bf16[128,512], index: 4, kind: input, shape index: {}]
  %s5 = inlined_call_operand.vmem [shape: f32[2,64], index: 5, kind: input, shape index: {}]
  %s6 = inlined_call_operand.vmem [shape: f32[2,32], index: 6, kind: input, shape index: {}]
  %s7 = inlined_call_operand.vmem [shape: f32[2,8], index: 7, kind: input, shape index: {}]
  %s8 = inlined_call_operand.vmem [shape: f32[64,128], index: 8, kind: output, shape index: {}]
  %s9 = sld [smem:[#allocation0]]
  $region58: #{generator_pix_forward.1} parent=0
    _
  %s11 = ssub.s32 1, %s9
  %s12 = scalar_select 0, %s11, %s9
  $region1: #{generator_pix_forward.1} parent=0
    #allocation2 [shape = 'u8[32768]{0}', space=vmem, size = 0x8000, scoped, tag = 'input window, operand 1, single buffered']
    #allocation3 [shape = 's32[1]{0}', space=sflag, size = 0x4, scoped, tag = 'scoped memory for generator_pix_forward.1']
    #allocation4 [shape = 'u8[524288]{0}', space=vmem, size = 0x80000, scoped, tag = 'input window, operand 2, single buffered']
    #allocation5 [shape = 's32[1]{0}', space=sflag, size = 0x4, scoped, tag = 'scoped memory for generator_pix_forward.1']
    #allocation6 [shape = 'u8[262144]{0}', space=vmem, size = 0x40000, scoped, tag = 'input window, operand 3, single buffered']
    #allocation7 [shape = 'u8[131072]{0}', space=vmem, size = 0x20000, scoped, tag = 'input window, operand 4, single buffered']
    #allocation8 [shape = 's32[1]{0}', space=sflag, size = 0x4, scoped, tag = 'scoped memory for generator_pix_forward.1']
    %13 = vsyncpa [#allocation3], 0
    %14 = vsyncpa [#allocation5], 0
    %15 = vsyncpa [#allocation8], 0
    // Predicated region
    $region2: #{generator_pix_forward.1} parent=1 // pred_check
      _
    $region3: #{generator_pix_forward.1} parent=1 // pred_check_branch
      %17 = sbr.rel (0) target = $region5
    $region4: #{generator_pix_forward.1} parent=1 // pred_region
      _
    $region5: #{generator_pix_forward.1} parent=1 // pred_fallthru
      _
    // Predicated region
    $region6: #{generator_pix_forward.1} parent=1 // pred_check
      _
    $region7: #{generator_pix_forward.1} parent=1 // pred_check_branch
      %19 = sbr.rel (0) target = $region9
    $region8: #{generator_pix_forward.1} parent=1 // pred_region
      %s21 = ssub.s32 1024, 1024
      %22 = vsyncadd [#allocation3], %s21
      %s23 = sshll.u32 [#allocation2], 4
      %s24 = int_to_ptr.vmem [resolvable:$true] %s23
      %29 = dma.hbm_to_vmem [thread:$0]  %s1, 1024, %s24, [#allocation3], 512, 512, 32
    $region9: #{generator_pix_forward.1} parent=1 // pred_fallthru
      _
    // Predicated region
    $region10: #{generator_pix_forward.1} parent=1 // pred_check
      _
    $region11: #{generator_pix_forward.1} parent=1 // pred_check_branch
      %31 = sbr.rel (0) target = $region13
    $region12: #{generator_pix_forward.1} parent=1 // pred_region
      %s33 = ssub.s32 16384, 16384
      %34 = vsyncadd [#allocation5], %s33
      %s35 = sshll.u32 [#allocation4], 4
      %s36 = int_to_ptr.vmem [resolvable:$true] %s35
      %41 = dma.hbm_to_vmem [thread:$0]  %s2, 16384, %s36, [#allocation5], 512, 512, 32
    $region13: #{generator_pix_forward.1} parent=1 // pred_fallthru
      _
    // Predicated region
    $region14: #{generator_pix_forward.1} parent=1 // pred_check
      _
    $region15: #{generator_pix_forward.1} parent=1 // pred_check_branch
      %43 = sbr.rel (0) target = $region17
    $region16: #{generator_pix_forward.1} parent=1 // pred_region
      %s45 = ssub.s32 8192, 8192
      %46 = vsyncadd [#allocation5], %s45
      %s47 = sshll.u32 [#allocation6], 4
      %s48 = int_to_ptr.vmem [resolvable:$true] %s47
      %53 = dma.hbm_to_vmem [thread:$0]  %s3, 8192, %s48, [#allocation5], 256, 256, 16
    $region17: #{generator_pix_forward.1} parent=1 // pred_fallthru
      _
    // Predicated region
    $region18: #{generator_pix_forward.1} parent=1 // pred_check
      _
    $region19: #{generator_pix_forward.1} parent=1 // pred_check_branch
      %55 = sbr.rel (0) target = $region21
    $region20: #{generator_pix_forward.1} parent=1 // pred_region
      %s57 = ssub.s32 4096, 4096
      %58 = vsyncadd [#allocation8], %s57
      %s59 = sshll.u32 [#allocation7], 4
      %s60 = int_to_ptr.vmem [resolvable:$true] %s59
      %65 = dma.hbm_to_vmem [thread:$0]  %s4, 4096, %s60, [#allocation8], 256, 256, 16
    $region21: #{generator_pix_forward.1} parent=1 // pred_fallthru
      _
    // Predicated region
    $region22: #{generator_pix_forward.1} parent=1 // pred_check
      _
    $region23: #{generator_pix_forward.1} parent=1 // pred_check_branch
      %67 = sbr.rel (0) target = $region25
    $region24: #{generator_pix_forward.1} parent=1 // pred_region
      _
    $region25: #{generator_pix_forward.1} parent=1 // pred_fallthru
      _
    // Predicated region
    $region26: #{generator_pix_forward.1} parent=1 // pred_check
      _
    $region27: #{generator_pix_forward.1} parent=1 // pred_check_branch
      %69 = sbr.rel (0) target = $region29
    $region28: #{generator_pix_forward.1} parent=1 // pred_region
      _
    $region29: #{generator_pix_forward.1} parent=1 // pred_fallthru
      _
    // Predicated region
    $region30: #{generator_pix_forward.1} parent=1 // pred_check
      _
    $region31: #{generator_pix_forward.1} parent=1 // pred_check_branch
      %71 = sbr.rel (0) target = $region33
    $region32: #{generator_pix_forward.1} parent=1 // pred_region
      _
    $region33: #{generator_pix_forward.1} parent=1 // pred_fallthru
      _
    // Predicated region
    $region34: #{generator_pix_forward.1} parent=1 // pred_check
      _
    $region35: #{generator_pix_forward.1} parent=1 // pred_check_branch
      %73 = sbr.rel (0) target = $region37
    $region36: #{generator_pix_forward.1} parent=1 // pred_region
      %74 = dma.done [#allocation3], 1024
    $region37: #{generator_pix_forward.1} parent=1 // pred_fallthru
      _
    // Predicated region
    $region38: #{generator_pix_forward.1} parent=1 // pred_check
      _
    $region39: #{generator_pix_forward.1} parent=1 // pred_check_branch
      %76 = sbr.rel (0) target = $region41
    $region40: #{generator_pix_forward.1} parent=1 // pred_region
      %77 = dma.done [#allocation5], 16384
    $region41: #{generator_pix_forward.1} parent=1 // pred_fallthru
      _
    // Predicated region
    $region42: #{generator_pix_forward.1} parent=1 // pred_check
      _
    $region43: #{generator_pix_forward.1} parent=1 // pred_check_branch
      %79 = sbr.rel (0) target = $region45
    $region44: #{generator_pix_forward.1} parent=1 // pred_region
      %80 = dma.done [#allocation5], 8192
    $region45: #{generator_pix_forward.1} parent=1 // pred_fallthru
      _
    // Predicated region
    $region46: #{generator_pix_forward.1} parent=1 // pred_check
      _
    $region47: #{generator_pix_forward.1} parent=1 // pred_check_branch
      %82 = sbr.rel (0) target = $region49
    $region48: #{generator_pix_forward.1} parent=1 // pred_region
      %83 = dma.done [#allocation8], 4096
    $region49: #{generator_pix_forward.1} parent=1 // pred_fallthru
      _
    %v85 = vld [vmem:[%s0] sm:$0x3]
    %v86 = vpack.c.bf16 %v85, %v85
    %v87 = vld [vmem:[#allocation2] sm:$0xff]
    %v88 = vld [vmem:[#allocation2 + $0x8] sm:$0xff]
    %v89 = vld [vmem:[#allocation2 + $0x10] sm:$0xff]
    %v90 = vld [vmem:[#allocation2 + $0x18] sm:$0xff]
    %v91 = vld [vmem:[#allocation2 + $0x20] sm:$0xff]
    %v92 = vld [vmem:[#allocation2 + $0x28] sm:$0xff]
    %v93 = vld [vmem:[#allocation2 + $0x30] sm:$0xff]
    %v94 = vld [vmem:[#allocation2 + $0x38] sm:$0xff]
    %v103 = vunpack.c.l.b16 %v87
    %v104 = vunpack.c.h.b16 %v87
    %v105 = vunpack.c.l.b16 %v88
    %v106 = vunpack.c.h.b16 %v88
    %v107 = vunpack.c.l.b16 %v89
    %v108 = vunpack.c.h.b16 %v89
    %v109 = vunpack.c.l.b16 %v90
    %v110 = vunpack.c.h.b16 %v90
    %v111 = vunpack.c.l.b16 %v91
    %v112 = vunpack.c.h.b16 %v91
    %v113 = vunpack.c.l.b16 %v92
    %v114 = vunpack.c.h.b16 %v92
    %v115 = vunpack.c.l.b16 %v93
    %v116 = vunpack.c.h.b16 %v93
    %v117 = vunpack.c.l.b16 %v94
    %v118 = vunpack.c.h.b16 %v94
    %v119 = vpack.c.b16 %v111, %v103
    %v120 = vpack.c.b16 %v112, %v104
    %v121 = vpack.c.b16 %v113, %v105
    %v122 = vpack.c.b16 %v114, %v106
    %v123 = vpack.c.b16 %v115, %v107
    %v124 = vpack.c.b16 %v116, %v108
    %v125 = vpack.c.b16 %v117, %v109
    %v126 = vpack.c.b16 %v118, %v110
    %vm135 = vcmask 130048
    %v137 = vsel %vm135, %v86, 0
    %139 = vmatprep.subr.bf16.mxu0 %v120
    %140 = vmatpush1.bf16.msra.mxu0 %v119
    %141 = vmatprep.subr.bf16.mxu0 0
    %142 = vmatpush1.bf16.msra.mxu0 0
    %143 = vmatprep.subr.bf16.mxu0 0
    %144 = vmatpush1.bf16.msra.mxu0 0
    %145 = vmatprep.subr.bf16.mxu0 0
    %146 = vmatpush1.bf16.msra.mxu0 0
    %147 = vmatprep.subr.bf16.mxu0 0
    %148 = vmatpush1.bf16.msra.mxu0 0
    %149 = vmatprep.subr.bf16.mxu0 0
    %150 = vmatpush1.bf16.msra.mxu0 0
    %151 = vmatprep.subr.bf16.mxu0 0
    %152 = vmatpush1.bf16.msra.mxu0 0
    %153 = vmatprep.subr.bf16.mxu0 0
    %154 = vmatpush1.bf16.msra.mxu0 0
    %155 = vmatprep.subr.bf16.mxu0 0
    %156 = vmatpush1.bf16.msra.mxu0 0
    %157 = vmatprep.subr.bf16.mxu0 0
    %158 = vmatpush1.bf16.msra.mxu0 0
    %159 = vmatprep.subr.bf16.mxu0 0
    %160 = vmatpush1.bf16.msra.mxu0 0
    %161 = vmatprep.subr.bf16.mxu0 0
    %162 = vmatpush1.bf16.msra.mxu0 0
    %163 = vmatprep.subr.bf16.mxu0 0
    %164 = vmatpush1.bf16.msra.mxu0 0
    %165 = vmatprep.subr.bf16.mxu0 0
    %166 = vmatpush1.bf16.msra.mxu0 0
    %167 = vmatprep.subr.bf16.mxu0 0
    %168 = vmatpush1.bf16.msra.mxu0 0
    %169 = vmatprep.subr.bf16.mxu0 0
    %170 = vmatpush1.bf16.msra.mxu0 0
    %171 = vmatprep.mubr.bf16.mxu0 0
    %172 = vmatmul.mubr.bf16.gmra.mrb[0].mxu0 %v137
    %v173 = vpop.f32.mrb[0].mxu0
    %v174 = vadd.f32 0.0, %v173
    %v175 = vpop.f32.mrb[0].mxu0
    %v176 = vadd.f32 0.0, %v175
    %v177 = vpop.f32.mrb[0].mxu0
    %v178 = vpop.f32.mrb[0].mxu0
    %179 = vdwg.mxu0
    %180 = vmatprep.subr.bf16.mxu0 %v122
    %181 = vmatpush1.bf16.msra.mxu0 %v121
    %182 = vmatprep.subr.bf16.mxu0 0
    %183 = vmatpush1.bf16.msra.mxu0 0
    %184 = vmatprep.subr.bf16.mxu0 0
    %185 = vmatpush1.bf16.msra.mxu0 0
    %186 = vmatprep.subr.bf16.mxu0 0
    %187 = vmatpush1.bf16.msra.mxu0 0
    %188 = vmatprep.subr.bf16.mxu0 0
    %189 = vmatpush1.bf16.msra.mxu0 0
    %190 = vmatprep.subr.bf16.mxu0 0
    %191 = vmatpush1.bf16.msra.mxu0 0
    %192 = vmatprep.subr.bf16.mxu0 0
    %193 = vmatpush1.bf16.msra.mxu0 0
    %194 = vmatprep.subr.bf16.mxu0 0
    %195 = vmatpush1.bf16.msra.mxu0 0
    %196 = vmatprep.subr.bf16.mxu0 0
    %197 = vmatpush1.bf16.msra.mxu0 0
    %198 = vmatprep.subr.bf16.mxu0 0
    %199 = vmatpush1.bf16.msra.mxu0 0
    %200 = vmatprep.subr.bf16.mxu0 0
    %201 = vmatpush1.bf16.msra.mxu0 0
    %202 = vmatprep.subr.bf16.mxu0 0
    %203 = vmatpush1.bf16.msra.mxu0 0
    %204 = vmatprep.subr.bf16.mxu0 0
    %205 = vmatpush1.bf16.msra.mxu0 0
    %206 = vmatprep.subr.bf16.mxu0 0
    %207 = vmatpush1.bf16.msra.mxu0 0
    %208 = vmatprep.subr.bf16.mxu0 0
    %209 = vmatpush1.bf16.msra.mxu0 0
    %210 = vmatprep.subr.bf16.mxu0 0
    %211 = vmatpush1.bf16.msra.mxu0 0
    %212 = vmatprep.mubr.bf16.mxu0 0
    %213 = vmatmul.mubr.bf16.gmra.mrb[0].mxu0 %v137
    %v214 = vpop.f32.mrb[0].mxu0
    %v215 = vadd.f32 0.0, %v214
    %v216 = vpop.f32.mrb[0].mxu0
    %v217 = vadd.f32 0.0, %v216
    %v218 = vpop.f32.mrb[0].mxu0
    %v219 = vpop.f32.mrb[0].mxu0
    %220 = vdwg.mxu0
    %221 = vmatprep.subr.bf16.mxu0 %v124
    %222 = vmatpush1.bf16.msra.mxu0 %v123
    %223 = vmatprep.subr.bf16.mxu0 0
    %224 = vmatpush1.bf16.msra.mxu0 0
    %225 = vmatprep.subr.bf16.mxu0 0
    %226 = vmatpush1.bf16.msra.mxu0 0
    %227 = vmatprep.subr.bf16.mxu0 0
    %228 = vmatpush1.bf16.msra.mxu0 0
    %229 = vmatprep.subr.bf16.mxu0 0
    %230 = vmatpush1.bf16.msra.mxu0 0
    %231 = vmatprep.subr.bf16.mxu0 0
    %232 = vmatpush1.bf16.msra.mxu0 0
    %233 = vmatprep.subr.bf16.mxu0 0
    %234 = vmatpush1.bf16.msra.mxu0 0
    %235 = vmatprep.subr.bf16.mxu0 0
    %236 = vmatpush1.bf16.msra.mxu0 0
    %237 = vmatprep.subr.bf16.mxu0 0
    %238 = vmatpush1.bf16.msra.mxu0 0
    %239 = vmatprep.subr.bf16.mxu0 0
    %240 = vmatpush1.bf16.msra.mxu0 0
    %241 = vmatprep.subr.bf16.mxu0 0
    %242 = vmatpush1.bf16.msra.mxu0 0
    %243 = vmatprep.subr.bf16.mxu0 0
    %244 = vmatpush1.bf16.msra.mxu0 0
    %245 = vmatprep.subr.bf16.mxu0 0
    %246 = vmatpush1.bf16.msra.mxu0 0
    %247 = vmatprep.subr.bf16.mxu0 0
    %248 = vmatpush1.bf16.msra.mxu0 0
    %249 = vmatprep.subr.bf16.mxu0 0
    %250 = vmatpush1.bf16.msra.mxu0 0
    %251 = vmatprep.subr.bf16.mxu0 0
    %252 = vmatpush1.bf16.msra.mxu0 0
    %253 = vmatprep.mubr.bf16.mxu0 0
    %254 = vmatmul.mubr.bf16.gmra.mrb[0].mxu0 %v137
    %v255 = vpop.f32.mrb[0].mxu0
    %v256 = vadd.f32 0.0, %v255
    %v257 = vpop.f32.mrb[0].mxu0
    %v258 = vadd.f32 0.0, %v257
    %v259 = vpop.f32.mrb[0].mxu0
    %v260 = vpop.f32.mrb[0].mxu0
    %261 = vdwg.mxu0
    %262 = vmatprep.subr.bf16.mxu0 %v126
    %263 = vmatpush1.bf16.msra.mxu0 %v125
    %264 = vmatprep.subr.bf16.mxu0 0
    %265 = vmatpush1.bf16.msra.mxu0 0
    %266 = vmatprep.subr.bf16.mxu0 0
    %267 = vmatpush1.bf16.msra.mxu0 0
    %268 = vmatprep.subr.bf16.mxu0 0
    %269 = vmatpush1.bf16.msra.mxu0 0
    %270 = vmatprep.subr.bf16.mxu0 0
    %271 = vmatpush1.bf16.msra.mxu0 0
    %272 = vmatprep.subr.bf16.mxu0 0
    %273 = vmatpush1.bf16.msra.mxu0 0
    %274 = vmatprep.subr.bf16.mxu0 0
    %275 = vmatpush1.bf16.msra.mxu0 0
    %276 = vmatprep.subr.bf16.mxu0 0
    %277 = vmatpush1.bf16.msra.mxu0 0
    %278 = vmatprep.subr.bf16.mxu0 0
    %279 = vmatpush1.bf16.msra.mxu0 0
    %280 = vmatprep.subr.bf16.mxu0 0
    %281 = vmatpush1.bf16.msra.mxu0 0
    %282 = vmatprep.subr.bf16.mxu0 0
    %283 = vmatpush1.bf16.msra.mxu0 0
    %284 = vmatprep.subr.bf16.mxu0 0
    %285 = vmatpush1.bf16.msra.mxu0 0
    %286 = vmatprep.subr.bf16.mxu0 0
    %287 = vmatpush1.bf16.msra.mxu0 0
    %288 = vmatprep.subr.bf16.mxu0 0
    %289 = vmatpush1.bf16.msra.mxu0 0
    %290 = vmatprep.subr.bf16.mxu0 0
    %291 = vmatpush1.bf16.msra.mxu0 0
    %292 = vmatprep.subr.bf16.mxu0 0
    %293 = vmatpush1.bf16.msra.mxu0 0
    %294 = vmatprep.mubr.bf16.mxu0 0
    %295 = vmatmul.mubr.bf16.gmra.mrb[0].mxu0 %v137
    %v296 = vpop.f32.mrb[0].mxu0
    %v297 = vadd.f32 0.0, %v296
    %v298 = vpop.f32.mrb[0].mxu0
    %v299 = vadd.f32 0.0, %v298
    %v300 = vpop.f32.mrb[0].mxu0
    %v301 = vpop.f32.mrb[0].mxu0
    %302 = vdwg.mxu0
    %v305 = vrot.slane %v215, 7
    %v306 = vrot.slane %v217, 7
    %v311 = vrot.slane %v256, 6
    %v312 = vrot.slane %v258, 6
    %v317 = vrot.slane %v297, 5
    %v318 = vrot.slane %v299, 5
    %v323 = vrot.slane %v174, 5
    %v324 = vrot.slane %v176, 5
    %v327 = vrot.slane %v215, 4
    %v328 = vrot.slane %v217, 4
    %v331 = vrot.slane %v256, 3
    %v332 = vrot.slane %v258, 3
    %v335 = vrot.slane %v297, 2
    %v336 = vrot.slane %v299, 2
    %vm339 = vcmask 1040384
    %v340 = vsel %vm339, %v174, %v305
    %v341 = vsel %vm339, %v176, %v306
    %vm342 = vcmask 1041408
    %v343 = vsel %vm342, %v340, %v311
    %v344 = vsel %vm342, %v341, %v312
    %vm345 = vcmask 1042432
    %v346 = vsel %vm345, %v343, %v317
    %v347 = vsel %vm345, %v344, %v318
    %vm348 = vcmask 1043456
    %v349 = vsel %vm348, %v346, %v323
    %v350 = vsel %vm348, %v347, %v324
    %vm351 = vcmask 1044480
    %v352 = vsel %vm351, %v349, %v327
    %v353 = vsel %vm351, %v350, %v328
    %vm354 = vcmask 1045504
    %v355 = vsel %vm354, %v352, %v331
    %v356 = vsel %vm354, %v353, %v332
    %vm357 = vcmask 1046528
    %v358 = vsel %vm357, %v355, %v335
    %v359 = vsel %vm357, %v356, %v336
    %v360 = vld [vmem:[%s5] sm:$0x3]
    %v361 = vrot.slane %v358, 4
    %v362 = vadd.f32 %v358, %v361
    %v363 = vrot.slane %v362, 2
    %v364 = vadd.f32 %v362, %v363
    %v365 = vrot.slane %v364, 1
    %v366 = vadd.f32 %v364, %v365
    %v367 = vrot.slane %v359, 4
    %v368 = vadd.f32 %v359, %v367
    %v369 = vrot.slane %v368, 2
    %v370 = vadd.f32 %v368, %v369
    %v371 = vrot.slane %v370, 1
    %v372 = vadd.f32 %v370, %v371
    %v373 = vmul.f32 %v358, %v358
    %v374 = vmul.f32 %v359, %v359
    %v375 = vrot.slane %v373, 4
    %v376 = vadd.f32 %v373, %v375
    %v377 = vrot.slane %v376, 2
    %v378 = vadd.f32 %v376, %v377
    %v379 = vrot.slane %v378, 1
    %v380 = vadd.f32 %v378, %v379
    %v381 = vrot.slane %v374, 4
    %v382 = vadd.f32 %v374, %v381
    %v383 = vrot.slane %v382, 2
    %v384 = vadd.f32 %v382, %v383
    %v385 = vrot.slane %v384, 1
    %v386 = vadd.f32 %v384, %v385
    %v387 = vsel %vm339, %v366, %v380
    %v388 = vsel %vm339, %v372, %v386
    %390 = vrot.lane.b32.xlu0 %v387, 64
    %v391 = vpop.permute.xlu0 %390
    %v393 = vadd.f32 %v387, %v391
    %v394 = vadd.f32 %v393, %v388
    %396 = vrot.lane.b32.xlu0 %v388, 64
    %v397 = vpop.permute.xlu0 %396
    %v399 = vadd.f32 %v394, %v397
    %v400 = vmul.f32 %v399, 0.03125
    %v401 = vmul.f32 %v400, %v400
    %v403 = vrot.slane %v401, 7
    %v405 = vsub.f32 %v400, %v403
    %v406 = vadd.f32 %v405, 1e-05
    %v407 = vrsqrt.pop %v406
    %v409 = vrot.slane %v407, 1
    %v411 = vmul.f32 %v360, %v409
    %v412 = vmul.f32 %v400, %v411
    %v414 = vrot.slane %v412, 7
    %v416 = vsub.f32 %v360, %v414
    %418 = vrot.lane.b32.xlu0 %v411, 64
    %v419 = vpop.permute.xlu0 %418
    %vm421 = vcmask 523264
    %v422 = vsel %vm421, %v411, %v419
    %424 = vrot.lane.b32.xlu0 %v416, 64
    %v425 = vpop.permute.xlu0 %424
    %v427 = vsel %vm421, %v416, %v425
    %v428 = vlaneseq
    %v429 = vshrl.u32 %v428, 7
    %v430 = vsub.s32 0, %v429
    %v431 = vrot.slane %v422, %v430
    %v432 = vmul.f32 %v358, %v431
    %v433 = vmul.f32 %v359, %v431
    %v434 = vlaneseq
    %v435 = vshrl.u32 %v434, 7
    %v436 = vsub.s32 1, %v435
    %v437 = vrot.slane %v427, %v436
    %v438 = vadd.f32 %v432, %v437
    %v439 = vadd.f32 %v433, %v437
    %v440 = vmax.f32 %v438, 0.0
    %v441 = vmax.f32 %v439, 0.0
    %v442 = vpack.c.bf16 %v440, %v440
    %v443 = vpack.c.bf16 %v441, %v441
    %v444 = vld [vmem:[#allocation4] sm:$0xff]
    %v445 = vld [vmem:[#allocation4 + $0x8] sm:$0xff]
    %v446 = vld [vmem:[#allocation4 + $0x10] sm:$0xff]
    %v447 = vld [vmem:[#allocation4 + $0x18] sm:$0xff]
    %v448 = vld [vmem:[#allocation4 + $0x20] sm:$0xff]
    %v449 = vld [vmem:[#allocation4 + $0x28] sm:$0xff]
    %v450 = vld [vmem:[#allocation4 + $0x30] sm:$0xff]
    %v451 = vld [vmem:[#allocation4 + $0x38] sm:$0xff]
    %v452 = vld [vmem:[#allocation4 + $0x40] sm:$0xff]
    %v453 = vld [vmem:[#allocation4 + $0x48] sm:$0xff]
    %v454 = vld [vmem:[#allocation4 + $0x50] sm:$0xff]
    %v455 = vld [vmem:[#allocation4 + $0x58] sm:$0xff]
    %v456 = vld [vmem:[#allocation4 + $0x60] sm:$0xff]
    %v457 = vld [vmem:[#allocation4 + $0x68] sm:$0xff]
    %v458 = vld [vmem:[#allocation4 + $0x70] sm:$0xff]
    %v459 = vld [vmem:[#allocation4 + $0x78] sm:$0xff]
    %v460 = vld [vmem:[#allocation4 + $0x80] sm:$0xff]
    %v461 = vld [vmem:[#allocation4 + $0x88] sm:$0xff]
    %v462 = vld [vmem:[#allocation4 + $0x90] sm:$0xff]
    %v463 = vld [vmem:[#allocation4 + $0x98] sm:$0xff]
    %v464 = vld [vmem:[#allocation4 + $0xa0] sm:$0xff]
    %v465 = vld [vmem:[#allocation4 + $0xa8] sm:$0xff]
    %v466 = vld [vmem:[#allocation4 + $0xb0] sm:$0xff]
    %v467 = vld [vmem:[#allocation4 + $0xb8] sm:$0xff]
    %v468 = vld [vmem:[#allocation4 + $0xc0] sm:$0xff]
    %v469 = vld [vmem:[#allocation4 + $0xc8] sm:$0xff]
    %v470 = vld [vmem:[#allocation4 + $0xd0] sm:$0xff]
    %v471 = vld [vmem:[#allocation4 + $0xd8] sm:$0xff]
    %v472 = vld [vmem:[#allocation4 + $0xe0] sm:$0xff]
    %v473 = vld [vmem:[#allocation4 + $0xe8] sm:$0xff]
    %v474 = vld [vmem:[#allocation4 + $0xf0] sm:$0xff]
    %v475 = vld [vmem:[#allocation4 + $0xf8] sm:$0xff]
    %v476 = vld [vmem:[#allocation4 + $0x100] sm:$0xff]
    %v477 = vld [vmem:[#allocation4 + $0x108] sm:$0xff]
    %v478 = vld [vmem:[#allocation4 + $0x110] sm:$0xff]
    %v479 = vld [vmem:[#allocation4 + $0x118] sm:$0xff]
    %v480 = vld [vmem:[#allocation4 + $0x120] sm:$0xff]
    %v481 = vld [vmem:[#allocation4 + $0x128] sm:$0xff]
    %v482 = vld [vmem:[#allocation4 + $0x130] sm:$0xff]
    %v483 = vld [vmem:[#allocation4 + $0x138] sm:$0xff]
    %v484 = vld [vmem:[#allocation4 + $0x140] sm:$0xff]
    %v485 = vld [vmem:[#allocation4 + $0x148] sm:$0xff]
    %v486 = vld [vmem:[#allocation4 + $0x150] sm:$0xff]
    %v487 = vld [vmem:[#allocation4 + $0x158] sm:$0xff]
    %v488 = vld [vmem:[#allocation4 + $0x160] sm:$0xff]
    %v489 = vld [vmem:[#allocation4 + $0x168] sm:$0xff]
    %v490 = vld [vmem:[#allocation4 + $0x170] sm:$0xff]
    %v491 = vld [vmem:[#allocation4 + $0x178] sm:$0xff]
    %v492 = vld [vmem:[#allocation4 + $0x180] sm:$0xff]
    %v493 = vld [vmem:[#allocation4 + $0x188] sm:$0xff]
    %v494 = vld [vmem:[#allocation4 + $0x190] sm:$0xff]
    %v495 = vld [vmem:[#allocation4 + $0x198] sm:$0xff]
    %v496 = vld [vmem:[#allocation4 + $0x1a0] sm:$0xff]
    %v497 = vld [vmem:[#allocation4 + $0x1a8] sm:$0xff]
    %v498 = vld [vmem:[#allocation4 + $0x1b0] sm:$0xff]
    %v499 = vld [vmem:[#allocation4 + $0x1b8] sm:$0xff]
    %v500 = vld [vmem:[#allocation4 + $0x1c0] sm:$0xff]
    %v501 = vld [vmem:[#allocation4 + $0x1c8] sm:$0xff]
    %v502 = vld [vmem:[#allocation4 + $0x1d0] sm:$0xff]
    %v503 = vld [vmem:[#allocation4 + $0x1d8] sm:$0xff]
    %v504 = vld [vmem:[#allocation4 + $0x1e0] sm:$0xff]
    %v505 = vld [vmem:[#allocation4 + $0x1e8] sm:$0xff]
    %v506 = vld [vmem:[#allocation4 + $0x1f0] sm:$0xff]
    %v507 = vld [vmem:[#allocation4 + $0x1f8] sm:$0xff]
    %v508 = vld [vmem:[#allocation4 + $0x200] sm:$0xff]
    %v509 = vld [vmem:[#allocation4 + $0x208] sm:$0xff]
    %v510 = vld [vmem:[#allocation4 + $0x210] sm:$0xff]
    %v511 = vld [vmem:[#allocation4 + $0x218] sm:$0xff]
    %v512 = vld [vmem:[#allocation4 + $0x220] sm:$0xff]
    %v513 = vld [vmem:[#allocation4 + $0x228] sm:$0xff]
    %v514 = vld [vmem:[#allocation4 + $0x230] sm:$0xff]
    %v515 = vld [vmem:[#allocation4 + $0x238] sm:$0xff]
    %v516 = vld [vmem:[#allocation4 + $0x240] sm:$0xff]
    %v517 = vld [vmem:[#allocation4 + $0x248] sm:$0xff]
    %v518 = vld [vmem:[#allocation4 + $0x250] sm:$0xff]
    %v519 = vld [vmem:[#allocation4 + $0x258] sm:$0xff]
    %v520 = vld [vmem:[#allocation4 + $0x260] sm:$0xff]
    %v521 = vld [vmem:[#allocation4 + $0x268] sm:$0xff]
    %v522 = vld [vmem:[#allocation4 + $0x270] sm:$0xff]
    %v523 = vld [vmem:[#allocation4 + $0x278] sm:$0xff]
    %v524 = vld [vmem:[#allocation4 + $0x280] sm:$0xff]
    %v525 = vld [vmem:[#allocation4 + $0x288] sm:$0xff]
    %v526 = vld [vmem:[#allocation4 + $0x290] sm:$0xff]
    %v527 = vld [vmem:[#allocation4 + $0x298] sm:$0xff]
    %v528 = vld [vmem:[#allocation4 + $0x2a0] sm:$0xff]
    %v529 = vld [vmem:[#allocation4 + $0x2a8] sm:$0xff]
    %v530 = vld [vmem:[#allocation4 + $0x2b0] sm:$0xff]
    %v531 = vld [vmem:[#allocation4 + $0x2b8] sm:$0xff]
    %v532 = vld [vmem:[#allocation4 + $0x2c0] sm:$0xff]
    %v533 = vld [vmem:[#allocation4 + $0x2c8] sm:$0xff]
    %v534 = vld [vmem:[#allocation4 + $0x2d0] sm:$0xff]
    %v535 = vld [vmem:[#allocation4 + $0x2d8] sm:$0xff]
    %v536 = vld [vmem:[#allocation4 + $0x2e0] sm:$0xff]
    %v537 = vld [vmem:[#allocation4 + $0x2e8] sm:$0xff]
    %v538 = vld [vmem:[#allocation4 + $0x2f0] sm:$0xff]
    %v539 = vld [vmem:[#allocation4 + $0x2f8] sm:$0xff]
    %v540 = vld [vmem:[#allocation4 + $0x300] sm:$0xff]
    %v541 = vld [vmem:[#allocation4 + $0x308] sm:$0xff]
    %v542 = vld [vmem:[#allocation4 + $0x310] sm:$0xff]
    %v543 = vld [vmem:[#allocation4 + $0x318] sm:$0xff]
    %v544 = vld [vmem:[#allocation4 + $0x320] sm:$0xff]
    %v545 = vld [vmem:[#allocation4 + $0x328] sm:$0xff]
    %v546 = vld [vmem:[#allocation4 + $0x330] sm:$0xff]
    %v547 = vld [vmem:[#allocation4 + $0x338] sm:$0xff]
    %v548 = vld [vmem:[#allocation4 + $0x340] sm:$0xff]
    %v549 = vld [vmem:[#allocation4 + $0x348] sm:$0xff]
    %v550 = vld [vmem:[#allocation4 + $0x350] sm:$0xff]
    %v551 = vld [vmem:[#allocation4 + $0x358] sm:$0xff]
    %v552 = vld [vmem:[#allocation4 + $0x360] sm:$0xff]
    %v553 = vld [vmem:[#allocation4 + $0x368] sm:$0xff]
    %v554 = vld [vmem:[#allocation4 + $0x370] sm:$0xff]
    %v555 = vld [vmem:[#allocation4 + $0x378] sm:$0xff]
    %v556 = vld [vmem:[#allocation4 + $0x380] sm:$0xff]
    %v557 = vld [vmem:[#allocation4 + $0x388] sm:$0xff]
    %v558 = vld [vmem:[#allocation4 + $0x390] sm:$0xff]
    %v559 = vld [vmem:[#allocation4 + $0x398] sm:$0xff]
    %v560 = vld [vmem:[#allocation4 + $0x3a0] sm:$0xff]
    %v561 = vld [vmem:[#allocation4 + $0x3a8] sm:$0xff]
    %v562 = vld [vmem:[#allocation4 + $0x3b0] sm:$0xff]
    %v563 = vld [vmem:[#allocation4 + $0x3b8] sm:$0xff]
    %v564 = vld [vmem:[#allocation4 + $0x3c0] sm:$0xff]
    %v565 = vld [vmem:[#allocation4 + $0x3c8] sm:$0xff]
    %v566 = vld [vmem:[#allocation4 + $0x3d0] sm:$0xff]
    %v567 = vld [vmem:[#allocation4 + $0x3d8] sm:$0xff]
    %v568 = vld [vmem:[#allocation4 + $0x3e0] sm:$0xff]
    %v569 = vld [vmem:[#allocation4 + $0x3e8] sm:$0xff]
    %v570 = vld [vmem:[#allocation4 + $0x3f0] sm:$0xff]
    %v571 = vld [vmem:[#allocation4 + $0x3f8] sm:$0xff]
    %v700 = vunpack.c.l.b16 %v444
    %v701 = vunpack.c.h.b16 %v444
    %v702 = vunpack.c.l.b16 %v445
    %v703 = vunpack.c.h.b16 %v445
    %v704 = vunpack.c.l.b16 %v446
    %v705 = vunpack.c.h.b16 %v446
    %v706 = vunpack.c.l.b16 %v447
    %v707 = vunpack.c.h.b16 %v447
    %v708 = vunpack.c.l.b16 %v448
    %v709 = vunpack.c.h.b16 %v448
    %v710 = vunpack.c.l.b16 %v449
    %v711 = vunpack.c.h.b16 %v449
    %v712 = vunpack.c.l.b16 %v450
    %v713 = vunpack.c.h.b16 %v450
    %v714 = vunpack.c.l.b16 %v451
    %v715 = vunpack.c.h.b16 %v451
    %v716 = vunpack.c.l.b16 %v452
    %v717 = vunpack.c.h.b16 %v452
    %v718 = vunpack.c.l.b16 %v453
    %v719 = vunpack.c.h.b16 %v453
    %v720 = vunpack.c.l.b16 %v454
    %v721 = vunpack.c.h.b16 %v454
    %v722 = vunpack.c.l.b16 %v455
    %v723 = vunpack.c.h.b16 %v455
    %v724 = vunpack.c.l.b16 %v456
    %v725 = vunpack.c.h.b16 %v456
    %v726 = vunpack.c.l.b16 %v457
    %v727 = vunpack.c.h.b16 %v457
    %v728 = vunpack.c.l.b16 %v458
    %v729 = vunpack.c.h.b16 %v458
    %v730 = vunpack.c.l.b16 %v459
    %v731 = vunpack.c.h.b16 %v459
    %v732 = vunpack.c.l.b16 %v460
    %v733 = vunpack.c.h.b16 %v460
    %v734 = vunpack.c.l.b16 %v461
    %v735 = vunpack.c.h.b16 %v461
    %v736 = vunpack.c.l.b16 %v462
    %v737 = vunpack.c.h.b16 %v462
    %v738 = vunpack.c.l.b16 %v463
    %v739 = vunpack.c.h.b16 %v463
    %v740 = vunpack.c.l.b16 %v464
    %v741 = vunpack.c.h.b16 %v464
    %v742 = vunpack.c.l.b16 %v465
    %v743 = vunpack.c.h.b16 %v465
    %v744 = vunpack.c.l.b16 %v466
    %v745 = vunpack.c.h.b16 %v466
    %v746 = vunpack.c.l.b16 %v467
    %v747 = vunpack.c.h.b16 %v467
    %v748 = vunpack.c.l.b16 %v468
    %v749 = vunpack.c.h.b16 %v468
    %v750 = vunpack.c.l.b16 %v469
    %v751 = vunpack.c.h.b16 %v469
    %v752 = vunpack.c.l.b16 %v470
    %v753 = vunpack.c.h.b16 %v470
    %v754 = vunpack.c.l.b16 %v471
    %v755 = vunpack.c.h.b16 %v471
    %v756 = vunpack.c.l.b16 %v472
    %v757 = vunpack.c.h.b16 %v472
    %v758 = vunpack.c.l.b16 %v473
    %v759 = vunpack.c.h.b16 %v473
    %v760 = vunpack.c.l.b16 %v474
    %v761 = vunpack.c.h.b16 %v474
    %v762 = vunpack.c.l.b16 %v475
    %v763 = vunpack.c.h.b16 %v475
    %v764 = vunpack.c.l.b16 %v476
    %v765 = vunpack.c.h.b16 %v476
    %v766 = vunpack.c.l.b16 %v477
    %v767 = vunpack.c.h.b16 %v477
    %v768 = vunpack.c.l.b16 %v478
    %v769 = vunpack.c.h.b16 %v478
    %v770 = vunpack.c.l.b16 %v479
    %v771 = vunpack.c.h.b16 %v479
    %v772 = vunpack.c.l.b16 %v480
    %v773 = vunpack.c.h.b16 %v480
    %v774 = vunpack.c.l.b16 %v481
    %v775 = vunpack.c.h.b16 %v481
    %v776 = vunpack.c.l.b16 %v482
    %v777 = vunpack.c.h.b16 %v482
    %v778 = vunpack.c.l.b16 %v483
    %v779 = vunpack.c.h.b16 %v483
    %v780 = vunpack.c.l.b16 %v484
    %v781 = vunpack.c.h.b16 %v484
    %v782 = vunpack.c.l.b16 %v485
    %v783 = vunpack.c.h.b16 %v485
    %v784 = vunpack.c.l.b16 %v486
    %v785 = vunpack.c.h.b16 %v486
    %v786 = vunpack.c.l.b16 %v487
    %v787 = vunpack.c.h.b16 %v487
    %v788 = vunpack.c.l.b16 %v488
    %v789 = vunpack.c.h.b16 %v488
    %v790 = vunpack.c.l.b16 %v489
    %v791 = vunpack.c.h.b16 %v489
    %v792 = vunpack.c.l.b16 %v490
    %v793 = vunpack.c.h.b16 %v490
    %v794 = vunpack.c.l.b16 %v491
    %v795 = vunpack.c.h.b16 %v491
    %v796 = vunpack.c.l.b16 %v492
    %v797 = vunpack.c.h.b16 %v492
    %v798 = vunpack.c.l.b16 %v493
    %v799 = vunpack.c.h.b16 %v493
    %v800 = vunpack.c.l.b16 %v494
    %v801 = vunpack.c.h.b16 %v494
    %v802 = vunpack.c.l.b16 %v495
    %v803 = vunpack.c.h.b16 %v495
    %v804 = vunpack.c.l.b16 %v496
    %v805 = vunpack.c.h.b16 %v496
    %v806 = vunpack.c.l.b16 %v497
    %v807 = vunpack.c.h.b16 %v497
    %v808 = vunpack.c.l.b16 %v498
    %v809 = vunpack.c.h.b16 %v498
    %v810 = vunpack.c.l.b16 %v499
    %v811 = vunpack.c.h.b16 %v499
    %v812 = vunpack.c.l.b16 %v500
    %v813 = vunpack.c.h.b16 %v500
    %v814 = vunpack.c.l.b16 %v501
    %v815 = vunpack.c.h.b16 %v501
    %v816 = vunpack.c.l.b16 %v502
    %v817 = vunpack.c.h.b16 %v502
    %v818 = vunpack.c.l.b16 %v503
    %v819 = vunpack.c.h.b16 %v503
    %v820 = vunpack.c.l.b16 %v504
    %v821 = vunpack.c.h.b16 %v504
    %v822 = vunpack.c.l.b16 %v505
    %v823 = vunpack.c.h.b16 %v505
    %v824 = vunpack.c.l.b16 %v506
    %v825 = vunpack.c.h.b16 %v506
    %v826 = vunpack.c.l.b16 %v507
    %v827 = vunpack.c.h.b16 %v507
    %v828 = vunpack.c.l.b16 %v508
    %v829 = vunpack.c.h.b16 %v508
    %v830 = vunpack.c.l.b16 %v509
    %v831 = vunpack.c.h.b16 %v509
    %v832 = vunpack.c.l.b16 %v510
    %v833 = vunpack.c.h.b16 %v510
    %v834 = vunpack.c.l.b16 %v511
    %v835 = vunpack.c.h.b16 %v511
    %v836 = vunpack.c.l.b16 %v512
    %v837 = vunpack.c.h.b16 %v512
    %v838 = vunpack.c.l.b16 %v513
    %v839 = vunpack.c.h.b16 %v513
    %v840 = vunpack.c.l.b16 %v514
    %v841 = vunpack.c.h.b16 %v514
    %v842 = vunpack.c.l.b16 %v515
    %v843 = vunpack.c.h.b16 %v515
    %v844 = vunpack.c.l.b16 %v516
    %v845 = vunpack.c.h.b16 %v516
    %v846 = vunpack.c.l.b16 %v517
    %v847 = vunpack.c.h.b16 %v517
    %v848 = vunpack.c.l.b16 %v518
    %v849 = vunpack.c.h.b16 %v518
    %v850 = vunpack.c.l.b16 %v519
    %v851 = vunpack.c.h.b16 %v519
    %v852 = vunpack.c.l.b16 %v520
    %v853 = vunpack.c.h.b16 %v520
    %v854 = vunpack.c.l.b16 %v521
    %v855 = vunpack.c.h.b16 %v521
    %v856 = vunpack.c.l.b16 %v522
    %v857 = vunpack.c.h.b16 %v522
    %v858 = vunpack.c.l.b16 %v523
    %v859 = vunpack.c.h.b16 %v523
    %v860 = vunpack.c.l.b16 %v524
    %v861 = vunpack.c.h.b16 %v524
    %v862 = vunpack.c.l.b16 %v525
    %v863 = vunpack.c.h.b16 %v525
    %v864 = vunpack.c.l.b16 %v526
    %v865 = vunpack.c.h.b16 %v526
    %v866 = vunpack.c.l.b16 %v527
    %v867 = vunpack.c.h.b16 %v527
    %v868 = vunpack.c.l.b16 %v528
    %v869 = vunpack.c.h.b16 %v528
    %v870 = vunpack.c.l.b16 %v529
    %v871 = vunpack.c.h.b16 %v529
    %v872 = vunpack.c.l.b16 %v530
    %v873 = vunpack.c.h.b16 %v530
    %v874 = vunpack.c.l.b16 %v531
    %v875 = vunpack.c.h.b16 %v531
    %v876 = vunpack.c.l.b16 %v532
    %v877 = vunpack.c.h.b16 %v532
    %v878 = vunpack.c.l.b16 %v533
    %v879 = vunpack.c.h.b16 %v533
    %v880 = vunpack.c.l.b16 %v534
    %v881 = vunpack.c.h.b16 %v534
    %v882 = vunpack.c.l.b16 %v535
    %v883 = vunpack.c.h.b16 %v535
    %v884 = vunpack.c.l.b16 %v536
    %v885 = vunpack.c.h.b16 %v536
    %v886 = vunpack.c.l.b16 %v537
    %v887 = vunpack.c.h.b16 %v537
    %v888 = vunpack.c.l.b16 %v538
    %v889 = vunpack.c.h.b16 %v538
    %v890 = vunpack.c.l.b16 %v539
    %v891 = vunpack.c.h.b16 %v539
    %v892 = vunpack.c.l.b16 %v540
    %v893 = vunpack.c.h.b16 %v540
    %v894 = vunpack.c.l.b16 %v541
    %v895 = vunpack.c.h.b16 %v541
    %v896 = vunpack.c.l.b16 %v542
    %v897 = vunpack.c.h.b16 %v542
    %v898 = vunpack.c.l.b16 %v543
    %v899 = vunpack.c.h.b16 %v543
    %v900 = vunpack.c.l.b16 %v544
    %v901 = vunpack.c.h.b16 %v544
    %v902 = vunpack.c.l.b16 %v545
    %v903 = vunpack.c.h.b16 %v545
    %v904 = vunpack.c.l.b16 %v546
    %v905 = vunpack.c.h.b16 %v546
    %v906 = vunpack.c.l.b16 %v547
    %v907 = vunpack.c.h.b16 %v547
    %v908 = vunpack.c.l.b16 %v548
    %v909 = vunpack.c.h.b16 %v548
    %v910 = vunpack.c.l.b16 %v549
    %v911 = vunpack.c.h.b16 %v549
    %v912 = vunpack.c.l.b16 %v550
    %v913 = vunpack.c.h.b16 %v550
    %v914 = vunpack.c.l.b16 %v551
    %v915 = vunpack.c.h.b16 %v551
    %v916 = vunpack.c.l.b16 %v552
    %v917 = vunpack.c.h.b16 %v552
    %v918 = vunpack.c.l.b16 %v553
    %v919 = vunpack.c.h.b16 %v553
    %v920 = vunpack.c.l.b16 %v554
    %v921 = vunpack.c.h.b16 %v554
    %v922 = vunpack.c.l.b16 %v555
    %v923 = vunpack.c.h.b16 %v555
    %v924 = vunpack.c.l.b16 %v556
    %v925 = vunpack.c.h.b16 %v556
    %v926 = vunpack.c.l.b16 %v557
    %v927 = vunpack.c.h.b16 %v557
    %v928 = vunpack.c.l.b16 %v558
    %v929 = vunpack.c.h.b16 %v558
    %v930 = vunpack.c.l.b16 %v559
    %v931 = vunpack.c.h.b16 %v559
    %v932 = vunpack.c.l.b16 %v560
    %v933 = vunpack.c.h.b16 %v560
    %v934 = vunpack.c.l.b16 %v561
    %v935 = vunpack.c.h.b16 %v561
    %v936 = vunpack.c.l.b16 %v562
    %v937 = vunpack.c.h.b16 %v562
    %v938 = vunpack.c.l.b16 %v563
    %v939 = vunpack.c.h.b16 %v563
    %v940 = vunpack.c.l.b16 %v564
    %v941 = vunpack.c.h.b16 %v564
    %v942 = vunpack.c.l.b16 %v565
    %v943 = vunpack.c.h.b16 %v565
    %v944 = vunpack.c.l.b16 %v566
    %v945 = vunpack.c.h.b16 %v566
    %v946 = vunpack.c.l.b16 %v567
    %v947 = vunpack.c.h.b16 %v567
    %v948 = vunpack.c.l.b16 %v568
    %v949 = vunpack.c.h.b16 %v568
    %v950 = vunpack.c.l.b16 %v569
    %v951 = vunpack.c.h.b16 %v569
    %v952 = vunpack.c.l.b16 %v570
    %v953 = vunpack.c.h.b16 %v570
    %v954 = vunpack.c.l.b16 %v571
    %v955 = vunpack.c.h.b16 %v571
    %v956 = vpack.c.b16 %v708, %v700
    %v957 = vpack.c.b16 %v709, %v701
    %v958 = vpack.c.b16 %v710, %v702
    %v959 = vpack.c.b16 %v711, %v703
    %v960 = vpack.c.b16 %v712, %v704
    %v961 = vpack.c.b16 %v713, %v705
    %v962 = vpack.c.b16 %v714, %v706
    %v963 = vpack.c.b16 %v715, %v707
    %v964 = vpack.c.b16 %v724, %v716
    %v965 = vpack.c.b16 %v725, %v717
    %v966 = vpack.c.b16 %v726, %v718
    %v967 = vpack.c.b16 %v727, %v719
    %v968 = vpack.c.b16 %v728, %v720
    %v969 = vpack.c.b16 %v729, %v721
    %v970 = vpack.c.b16 %v730, %v722
    %v971 = vpack.c.b16 %v731, %v723
    %v972 = vpack.c.b16 %v740, %v732
    %v973 = vpack.c.b16 %v741, %v733
    %v974 = vpack.c.b16 %v742, %v734
    %v975 = vpack.c.b16 %v743, %v735
    %v976 = vpack.c.b16 %v744, %v736
    %v977 = vpack.c.b16 %v745, %v737
    %v978 = vpack.c.b16 %v746, %v738
    %v979 = vpack.c.b16 %v747, %v739
    %v980 = vpack.c.b16 %v756, %v748
    %v981 = vpack.c.b16 %v757, %v749
    %v982 = vpack.c.b16 %v758, %v750
    %v983 = vpack.c.b16 %v759, %v751
    %v984 = vpack.c.b16 %v760, %v752
    %v985 = vpack.c.b16 %v761, %v753
    %v986 = vpack.c.b16 %v762, %v754
    %v987 = vpack.c.b16 %v763, %v755
    %v988 = vpack.c.b16 %v772, %v764
    %v989 = vpack.c.b16 %v773, %v765
    %v990 = vpack.c.b16 %v774, %v766
    %v991 = vpack.c.b16 %v775, %v767
    %v992 = vpack.c.b16 %v776, %v768
    %v993 = vpack.c.b16 %v777, %v769
    %v994 = vpack.c.b16 %v778, %v770
    %v995 = vpack.c.b16 %v779, %v771
    %v996 = vpack.c.b16 %v788, %v780
    %v997 = vpack.c.b16 %v789, %v781
    %v998 = vpack.c.b16 %v790, %v782
    %v999 = vpack.c.b16 %v791, %v783
    %v1000 = vpack.c.b16 %v792, %v784
    %v1001 = vpack.c.b16 %v793, %v785
    %v1002 = vpack.c.b16 %v794, %v786
    %v1003 = vpack.c.b16 %v795, %v787
    %v1004 = vpack.c.b16 %v804, %v796
    %v1005 = vpack.c.b16 %v805, %v797
    %v1006 = vpack.c.b16 %v806, %v798
    %v1007 = vpack.c.b16 %v807, %v799
    %v1008 = vpack.c.b16 %v808, %v800
    %v1009 = vpack.c.b16 %v809, %v801
    %v1010 = vpack.c.b16 %v810, %v802
    %v1011 = vpack.c.b16 %v811, %v803
    %v1012 = vpack.c.b16 %v820, %v812
    %v1013 = vpack.c.b16 %v821, %v813
    %v1014 = vpack.c.b16 %v822, %v814
    %v1015 = vpack.c.b16 %v823, %v815
    %v1016 = vpack.c.b16 %v824, %v816
    %v1017 = vpack.c.b16 %v825, %v817
    %v1018 = vpack.c.b16 %v826, %v818
    %v1019 = vpack.c.b16 %v827, %v819
    %v1020 = vpack.c.b16 %v836, %v828
    %v1021 = vpack.c.b16 %v837, %v829
    %v1022 = vpack.c.b16 %v838, %v830
    %v1023 = vpack.c.b16 %v839, %v831
    %v1024 = vpack.c.b16 %v840, %v832
    %v1025 = vpack.c.b16 %v841, %v833
    %v1026 = vpack.c.b16 %v842, %v834
    %v1027 = vpack.c.b16 %v843, %v835
    %v1028 = vpack.c.b16 %v852, %v844
    %v1029 = vpack.c.b16 %v853, %v845
    %v1030 = vpack.c.b16 %v854, %v846
    %v1031 = vpack.c.b16 %v855, %v847
    %v1032 = vpack.c.b16 %v856, %v848
    %v1033 = vpack.c.b16 %v857, %v849
    %v1034 = vpack.c.b16 %v858, %v850
    %v1035 = vpack.c.b16 %v859, %v851
    %v1036 = vpack.c.b16 %v868, %v860
    %v1037 = vpack.c.b16 %v869, %v861
    %v1038 = vpack.c.b16 %v870, %v862
    %v1039 = vpack.c.b16 %v871, %v863
    %v1040 = vpack.c.b16 %v872, %v864
    %v1041 = vpack.c.b16 %v873, %v865
    %v1042 = vpack.c.b16 %v874, %v866
    %v1043 = vpack.c.b16 %v875, %v867
    %v1044 = vpack.c.b16 %v884, %v876
    %v1045 = vpack.c.b16 %v885, %v877
    %v1046 = vpack.c.b16 %v886, %v878
    %v1047 = vpack.c.b16 %v887, %v879
    %v1048 = vpack.c.b16 %v888, %v880
    %v1049 = vpack.c.b16 %v889, %v881
    %v1050 = vpack.c.b16 %v890, %v882
    %v1051 = vpack.c.b16 %v891, %v883
    %v1052 = vpack.c.b16 %v900, %v892
    %v1053 = vpack.c.b16 %v901, %v893
    %v1054 = vpack.c.b16 %v902, %v894
    %v1055 = vpack.c.b16 %v903, %v895
    %v1056 = vpack.c.b16 %v904, %v896
    %v1057 = vpack.c.b16 %v905, %v897
    %v1058 = vpack.c.b16 %v906, %v898
    %v1059 = vpack.c.b16 %v907, %v899
    %v1060 = vpack.c.b16 %v916, %v908
    %v1061 = vpack.c.b16 %v917, %v909
    %v1062 = vpack.c.b16 %v918, %v910
    %v1063 = vpack.c.b16 %v919, %v911
    %v1064 = vpack.c.b16 %v920, %v912
    %v1065 = vpack.c.b16 %v921, %v913
    %v1066 = vpack.c.b16 %v922, %v914
    %v1067 = vpack.c.b16 %v923, %v915
    %v1068 = vpack.c.b16 %v932, %v924
    %v1069 = vpack.c.b16 %v933, %v925
    %v1070 = vpack.c.b16 %v934, %v926
    %v1071 = vpack.c.b16 %v935, %v927
    %v1072 = vpack.c.b16 %v936, %v928
    %v1073 = vpack.c.b16 %v937, %v929
    %v1074 = vpack.c.b16 %v938, %v930
    %v1075 = vpack.c.b16 %v939, %v931
    %v1076 = vpack.c.b16 %v948, %v940
    %v1077 = vpack.c.b16 %v949, %v941
    %v1078 = vpack.c.b16 %v950, %v942
    %v1079 = vpack.c.b16 %v951, %v943
    %v1080 = vpack.c.b16 %v952, %v944
    %v1081 = vpack.c.b16 %v953, %v945
    %v1082 = vpack.c.b16 %v954, %v946
    %v1083 = vpack.c.b16 %v955, %v947
    %1212 = vmatprep.subr.bf16.mxu0 %v957
    %1213 = vmatpush1.bf16.msra.mxu0 %v956
    %1214 = vmatprep.subr.bf16.mxu0 %v965
    %1215 = vmatpush1.bf16.msra.mxu0 %v964
    %1216 = vmatprep.subr.bf16.mxu0 %v973
    %1217 = vmatpush1.bf16.msra.mxu0 %v972
    %1218 = vmatprep.subr.bf16.mxu0 %v981
    %1219 = vmatpush1.bf16.msra.mxu0 %v980
    %1220 = vmatprep.subr.bf16.mxu0 %v989
    %1221 = vmatpush1.bf16.msra.mxu0 %v988
    %1222 = vmatprep.subr.bf16.mxu0 %v997
    %1223 = vmatpush1.bf16.msra.mxu0 %v996
    %1224 = vmatprep.subr.bf16.mxu0 %v1005
    %1225 = vmatpush1.bf16.msra.mxu0 %v1004
    %1226 = vmatprep.subr.bf16.mxu0 %v1013
    %1227 = vmatpush1.bf16.msra.mxu0 %v1012
    %1228 = vmatprep.subr.bf16.mxu0 %v1021
    %1229 = vmatpush1.bf16.msra.mxu0 %v1020
    %1230 = vmatprep.subr.bf16.mxu0 %v1029
    %1231 = vmatpush1.bf16.msra.mxu0 %v1028
    %1232 = vmatprep.subr.bf16.mxu0 %v1037
    %1233 = vmatpush1.bf16.msra.mxu0 %v1036
    %1234 = vmatprep.subr.bf16.mxu0 %v1045
    %1235 = vmatpush1.bf16.msra.mxu0 %v1044
    %1236 = vmatprep.subr.bf16.mxu0 %v1053
    %1237 = vmatpush1.bf16.msra.mxu0 %v1052
    %1238 = vmatprep.subr.bf16.mxu0 %v1061
    %1239 = vmatpush1.bf16.msra.mxu0 %v1060
    %1240 = vmatprep.subr.bf16.mxu0 %v1069
    %1241 = vmatpush1.bf16.msra.mxu0 %v1068
    %1242 = vmatprep.subr.bf16.mxu0 %v1077
    %1243 = vmatpush1.bf16.msra.mxu0 %v1076
    %1244 = vmatprep.mubr.bf16.mxu0 %v443
    %1245 = vmatmul.mubr.bf16.gmra.mrb[0].mxu0 %v442
    %v1246 = vpop.f32.mrb[0].mxu0
    %v1247 = vadd.f32 0.0, %v1246
    %v1248 = vpop.f32.mrb[0].mxu0
    %v1249 = vadd.f32 0.0, %v1248
    %v1250 = vpop.f32.mrb[0].mxu0
    %v1251 = vpop.f32.mrb[0].mxu0
    %1252 = vdwg.mxu0
    %1253 = vmatprep.subr.bf16.mxu0 %v959
    %1254 = vmatpush1.bf16.msra.mxu0 %v958
    %1255 = vmatprep.subr.bf16.mxu0 %v967
    %1256 = vmatpush1.bf16.msra.mxu0 %v966
    %1257 = vmatprep.subr.bf16.mxu0 %v975
    %1258 = vmatpush1.bf16.msra.mxu0 %v974
    %1259 = vmatprep.subr.bf16.mxu0 %v983
    %1260 = vmatpush1.bf16.msra.mxu0 %v982
    %1261 = vmatprep.subr.bf16.mxu0 %v991
    %1262 = vmatpush1.bf16.msra.mxu0 %v990
    %1263 = vmatprep.subr.bf16.mxu0 %v999
    %1264 = vmatpush1.bf16.msra.mxu0 %v998
    %1265 = vmatprep.subr.bf16.mxu0 %v1007
    %1266 = vmatpush1.bf16.msra.mxu0 %v1006
    %1267 = vmatprep.subr.bf16.mxu0 %v1015
    %1268 = vmatpush1.bf16.msra.mxu0 %v1014
    %1269 = vmatprep.subr.bf16.mxu0 %v1023
    %1270 = vmatpush1.bf16.msra.mxu0 %v1022
    %1271 = vmatprep.subr.bf16.mxu0 %v1031
    %1272 = vmatpush1.bf16.msra.mxu0 %v1030
    %1273 = vmatprep.subr.bf16.mxu0 %v1039
    %1274 = vmatpush1.bf16.msra.mxu0 %v1038
    %1275 = vmatprep.subr.bf16.mxu0 %v1047
    %1276 = vmatpush1.bf16.msra.mxu0 %v1046
    %1277 = vmatprep.subr.bf16.mxu0 %v1055
    %1278 = vmatpush1.bf16.msra.mxu0 %v1054
    %1279 = vmatprep.subr.bf16.mxu0 %v1063
    %1280 = vmatpush1.bf16.msra.mxu0 %v1062
    %1281 = vmatprep.subr.bf16.mxu0 %v1071
    %1282 = vmatpush1.bf16.msra.mxu0 %v1070
    %1283 = vmatprep.subr.bf16.mxu0 %v1079
    %1284 = vmatpush1.bf16.msra.mxu0 %v1078
    %1285 = vmatprep.mubr.bf16.mxu0 %v443
    %1286 = vmatmul.mubr.bf16.gmra.mrb[0].mxu0 %v442
    %v1287 = vpop.f32.mrb[0].mxu0
    %v1288 = vadd.f32 0.0, %v1287
    %v1289 = vpop.f32.mrb[0].mxu0
    %v1290 = vadd.f32 0.0, %v1289
    %v1291 = vpop.f32.mrb[0].mxu0
    %v1292 = vpop.f32.mrb[0].mxu0
    %1293 = vdwg.mxu0
    %1294 = vmatprep.subr.bf16.mxu0 %v961
    %1295 = vmatpush1.bf16.msra.mxu0 %v960
    %1296 = vmatprep.subr.bf16.mxu0 %v969
    %1297 = vmatpush1.bf16.msra.mxu0 %v968
    %1298 = vmatprep.subr.bf16.mxu0 %v977
    %1299 = vmatpush1.bf16.msra.mxu0 %v976
    %1300 = vmatprep.subr.bf16.mxu0 %v985
    %1301 = vmatpush1.bf16.msra.mxu0 %v984
    %1302 = vmatprep.subr.bf16.mxu0 %v993
    %1303 = vmatpush1.bf16.msra.mxu0 %v992
    %1304 = vmatprep.subr.bf16.mxu0 %v1001
    %1305 = vmatpush1.bf16.msra.mxu0 %v1000
    %1306 = vmatprep.subr.bf16.mxu0 %v1009
    %1307 = vmatpush1.bf16.msra.mxu0 %v1008
    %1308 = vmatprep.subr.bf16.mxu0 %v1017
    %1309 = vmatpush1.bf16.msra.mxu0 %v1016
    %1310 = vmatprep.subr.bf16.mxu0 %v1025
    %1311 = vmatpush1.bf16.msra.mxu0 %v1024
    %1312 = vmatprep.subr.bf16.mxu0 %v1033
    %1313 = vmatpush1.bf16.msra.mxu0 %v1032
    %1314 = vmatprep.subr.bf16.mxu0 %v1041
    %1315 = vmatpush1.bf16.msra.mxu0 %v1040
    %1316 = vmatprep.subr.bf16.mxu0 %v1049
    %1317 = vmatpush1.bf16.msra.mxu0 %v1048
    %1318 = vmatprep.subr.bf16.mxu0 %v1057
    %1319 = vmatpush1.bf16.msra.mxu0 %v1056
    %1320 = vmatprep.subr.bf16.mxu0 %v1065
    %1321 = vmatpush1.bf16.msra.mxu0 %v1064
    %1322 = vmatprep.subr.bf16.mxu0 %v1073
    %1323 = vmatpush1.bf16.msra.mxu0 %v1072
    %1324 = vmatprep.subr.bf16.mxu0 %v1081
    %1325 = vmatpush1.bf16.msra.mxu0 %v1080
    %1326 = vmatprep.mubr.bf16.mxu0 %v443
    %1327 = vmatmul.mubr.bf16.gmra.mrb[0].mxu0 %v442
    %v1328 = vpop.f32.mrb[0].mxu0
    %v1329 = vadd.f32 0.0, %v1328
    %v1330 = vpop.f32.mrb[0].mxu0
    %v1331 = vadd.f32 0.0, %v1330
    %v1332 = vpop.f32.mrb[0].mxu0
    %v1333 = vpop.f32.mrb[0].mxu0
    %1334 = vdwg.mxu0
    %1335 = vmatprep.subr.bf16.mxu0 %v963
    %1336 = vmatpush1.bf16.msra.mxu0 %v962
    %1337 = vmatprep.subr.bf16.mxu0 %v971
    %1338 = vmatpush1.bf16.msra.mxu0 %v970
    %1339 = vmatprep.subr.bf16.mxu0 %v979
    %1340 = vmatpush1.bf16.msra.mxu0 %v978
    %1341 = vmatprep.subr.bf16.mxu0 %v987
    %1342 = vmatpush1.bf16.msra.mxu0 %v986
    %1343 = vmatprep.subr.bf16.mxu0 %v995
    %1344 = vmatpush1.bf16.msra.mxu0 %v994
    %1345 = vmatprep.subr.bf16.mxu0 %v1003
    %1346 = vmatpush1.bf16.msra.mxu0 %v1002
    %1347 = vmatprep.subr.bf16.mxu0 %v1011
    %1348 = vmatpush1.bf16.msra.mxu0 %v1010
    %1349 = vmatprep.subr.bf16.mxu0 %v1019
    %1350 = vmatpush1.bf16.msra.mxu0 %v1018
    %1351 = vmatprep.subr.bf16.mxu0 %v1027
    %1352 = vmatpush1.bf16.msra.mxu0 %v1026
    %1353 = vmatprep.subr.bf16.mxu0 %v1035
    %1354 = vmatpush1.bf16.msra.mxu0 %v1034
    %1355 = vmatprep.subr.bf16.mxu0 %v1043
    %1356 = vmatpush1.bf16.msra.mxu0 %v1042
    %1357 = vmatprep.subr.bf16.mxu0 %v1051
    %1358 = vmatpush1.bf16.msra.mxu0 %v1050
    %1359 = vmatprep.subr.bf16.mxu0 %v1059
    %1360 = vmatpush1.bf16.msra.mxu0 %v1058
    %1361 = vmatprep.subr.bf16.mxu0 %v1067
    %1362 = vmatpush1.bf16.msra.mxu0 %v1066
    %1363 = vmatprep.subr.bf16.mxu0 %v1075
    %1364 = vmatpush1.bf16.msra.mxu0 %v1074
    %1365 = vmatprep.subr.bf16.mxu0 %v1083
    %1366 = vmatpush1.bf16.msra.mxu0 %v1082
    %1367 = vmatprep.mubr.bf16.mxu0 %v443
    %1368 = vmatmul.mubr.bf16.gmra.mrb[0].mxu0 %v442
    %v1369 = vpop.f32.mrb[0].mxu0
    %v1370 = vadd.f32 0.0, %v1369
    %v1371 = vpop.f32.mrb[0].mxu0
    %v1372 = vadd.f32 0.0, %v1371
    %v1373 = vpop.f32.mrb[0].mxu0
    %v1374 = vpop.f32.mrb[0].mxu0
    %1375 = vdwg.mxu0
    %v1378 = vrot.slane %v1370, 7
    %v1379 = vrot.slane %v1372, 7
    %v1382 = vsel %vm339, 0.0, %v1378
    %v1383 = vsel %vm339, 0.0, %v1379
    %v1384 = vadd.f32 %v1288, %v1382
    %v1385 = vadd.f32 %v1290, %v1383
    %v1388 = vrot.slane %v1247, 1
    %v1389 = vrot.slane %v1249, 1
    %v1392 = vsel %vm345, %v1388, 0.0
    %v1393 = vsel %vm345, %v1389, 0.0
    %v1394 = vadd.f32 %v1329, %v1392
    %v1395 = vadd.f32 %v1331, %v1393
    %v1396 = vrot.slane %v1370, 3
    %v1397 = vrot.slane %v1372, 3
    %v1400 = vsel %vm339, 0.0, %v1396
    %v1401 = vsel %vm339, 0.0, %v1397
    %v1404 = vrot.slane %v1400, 4
    %v1405 = vrot.slane %v1401, 4
    %v1408 = vadd.f32 %v1288, %v1404
    %v1409 = vadd.f32 %v1290, %v1405
    %v1410 = vrot.slane %v1247, 5
    %v1411 = vrot.slane %v1249, 5
    %v1414 = vsel %vm345, %v1410, 0.0
    %v1415 = vsel %vm345, %v1411, 0.0
    %v1418 = vrot.slane %v1414, 4
    %v1419 = vrot.slane %v1415, 4
    %v1422 = vadd.f32 %v1329, %v1418
    %v1423 = vadd.f32 %v1331, %v1419
    %v1426 = vrot.slane %v1394, 7
    %v1427 = vrot.slane %v1395, 7
    %v1432 = vrot.slane %v1384, 7
    %v1433 = vrot.slane %v1385, 7
    %v1436 = vrot.slane %v1394, 6
    %v1437 = vrot.slane %v1395, 6
    %v1440 = vrot.slane %v1384, 6
    %v1441 = vrot.slane %v1385, 6
    %v1444 = vrot.slane %v1394, 5
    %v1445 = vrot.slane %v1395, 5
    %v1448 = vrot.slane %v1384, 5
    %v1449 = vrot.slane %v1385, 5
    %v1452 = vrot.slane %v1394, 4
    %v1453 = vrot.slane %v1395, 4
    %v1458 = vrot.slane %v1408, 4
    %v1459 = vrot.slane %v1409, 4
    %v1464 = vrot.slane %v1422, 3
    %v1465 = vrot.slane %v1423, 3
    %v1468 = vrot.slane %v1408, 3
    %v1469 = vrot.slane %v1409, 3
    %v1472 = vrot.slane %v1422, 2
    %v1473 = vrot.slane %v1423, 2
    %v1476 = vrot.slane %v1408, 2
    %v1477 = vrot.slane %v1409, 2
    %v1480 = vrot.slane %v1422, 1
    %v1481 = vrot.slane %v1423, 1
    %v1484 = vrot.slane %v1408, 1
    %v1485 = vrot.slane %v1409, 1
    %v1488 = vsel %vm339, %v1384, %v1426
    %v1489 = vsel %vm339, %v1385, %v1427
    %v1490 = vsel %vm342, %v1488, %v1432
    %v1491 = vsel %vm342, %v1489, %v1433
    %v1492 = vsel %vm345, %v1490, %v1436
    %v1493 = vsel %vm345, %v1491, %v1437
    %v1494 = vsel %vm348, %v1492, %v1440
    %v1495 = vsel %vm348, %v1493, %v1441
    %v1496 = vsel %vm351, %v1494, %v1444
    %v1497 = vsel %vm351, %v1495, %v1445
    %v1498 = vsel %vm354, %v1496, %v1448
    %v1499 = vsel %vm354, %v1497, %v1449
    %v1500 = vsel %vm357, %v1498, %v1452
    %v1501 = vsel %vm357, %v1499, %v1453
    %v1502 = vsel %vm339, %v1458, %v1464
    %v1503 = vsel %vm339, %v1459, %v1465
    %v1504 = vsel %vm342, %v1502, %v1468
    %v1505 = vsel %vm342, %v1503, %v1469
    %v1506 = vsel %vm345, %v1504, %v1472
    %v1507 = vsel %vm345, %v1505, %v1473
    %v1508 = vsel %vm348, %v1506, %v1476
    %v1509 = vsel %vm348, %v1507, %v1477
    %v1510 = vsel %vm351, %v1508, %v1480
    %v1511 = vsel %vm351, %v1509, %v1481
    %v1512 = vsel %vm354, %v1510, %v1484
    %v1513 = vsel %vm354, %v1511, %v1485
    %v1514 = vsel %vm357, %v1512, %v1422
    %v1515 = vsel %vm357, %v1513, %v1423
    %v1516 = vld [vmem:[%s6] sm:$0x3]
    %v1517 = vadd.f32 %v1500, %v1514
    %v1518 = vrot.slane %v1517, 4
    %v1519 = vadd.f32 %v1517, %v1518
    %v1520 = vrot.slane %v1519, 2
    %v1521 = vadd.f32 %v1519, %v1520
    %v1522 = vrot.slane %v1521, 1
    %v1523 = vadd.f32 %v1521, %v1522
    %v1524 = vadd.f32 %v1501, %v1515
    %v1525 = vrot.slane %v1524, 4
    %v1526 = vadd.f32 %v1524, %v1525
    %v1527 = vrot.slane %v1526, 2
    %v1528 = vadd.f32 %v1526, %v1527
    %v1529 = vrot.slane %v1528, 1
    %v1530 = vadd.f32 %v1528, %v1529
    %v1531 = vmul.f32 %v1500, %v1500
    %v1532 = vmul.f32 %v1501, %v1501
    %v1533 = vmul.f32 %v1514, %v1514
    %v1534 = vmul.f32 %v1515, %v1515
    %v1535 = vadd.f32 %v1531, %v1533
    %v1536 = vrot.slane %v1535, 4
    %v1537 = vadd.f32 %v1535, %v1536
    %v1538 = vrot.slane %v1537, 2
    %v1539 = vadd.f32 %v1537, %v1538
    %v1540 = vrot.slane %v1539, 1
    %v1541 = vadd.f32 %v1539, %v1540
    %v1542 = vadd.f32 %v1532, %v1534
    %v1543 = vrot.slane %v1542, 4
    %v1544 = vadd.f32 %v1542, %v1543
    %v1545 = vrot.slane %v1544, 2
    %v1546 = vadd.f32 %v1544, %v1545
    %v1547 = vrot.slane %v1546, 1
    %v1548 = vadd.f32 %v1546, %v1547
    %v1549 = vsel %vm339, %v1523, %v1541
    %v1550 = vsel %vm339, %v1530, %v1548
    %1552 = vrot.lane.b32.xlu0 %v1549, 96
    %v1553 = vpop.permute.xlu0 %1552
    %v1555 = vadd.f32 %v1549, %v1553
    %1556 = vrot.lane.b32.xlu0 %v1549, 64
    %v1557 = vpop.permute.xlu0 %1556
    %v1559 = vadd.f32 %v1555, %v1557
    %1560 = vrot.lane.b32.xlu0 %v1549, 32
    %v1561 = vpop.permute.xlu0 %1560
    %v1563 = vadd.f32 %v1559, %v1561
    %v1564 = vadd.f32 %v1563, %v1550
    %1566 = vrot.lane.b32.xlu0 %v1550, 96
    %v1567 = vpop.permute.xlu0 %1566
    %v1569 = vadd.f32 %v1564, %v1567
    %1570 = vrot.lane.b32.xlu0 %v1550, 64
    %v1571 = vpop.permute.xlu0 %1570
    %v1573 = vadd.f32 %v1569, %v1571
    %1574 = vrot.lane.b32.xlu0 %v1550, 32
    %v1575 = vpop.permute.xlu0 %1574
    %v1577 = vadd.f32 %v1573, %v1575
    %v1578 = vmul.f32 %v1577, 0.0078125
    %v1579 = vmul.f32 %v1578, %v1578
    %v1581 = vrot.slane %v1579, 7
    %v1583 = vsub.f32 %v1578, %v1581
    %v1584 = vadd.f32 %v1583, 1e-05
    %v1585 = vrsqrt.pop %v1584
    %v1587 = vrot.slane %v1585, 1
    %v1589 = vmul.f32 %v1516, %v1587
    %v1590 = vmul.f32 %v1578, %v1589
    %v1592 = vrot.slane %v1590, 7
    %v1594 = vsub.f32 %v1516, %v1592
    %1596 = vrot.lane.b32.xlu0 %v1589, 32
    %v1597 = vpop.permute.xlu0 %1596
    %1599 = vrot.lane.b32.xlu0 %v1589, 64
    %v1600 = vpop.permute.xlu0 %1599
    %1602 = vrot.lane.b32.xlu0 %v1589, 96
    %v1603 = vpop.permute.xlu0 %1602
    %vm1605 = vcmask 261120
    %v1606 = vsel %vm1605, %v1589, %v1597
    %v1607 = vsel %vm421, %v1606, %v1600
    %vm1608 = vcmask 785408
    %v1609 = vsel %vm1608, %v1607, %v1603
    %1611 = vrot.lane.b32.xlu0 %v1594, 32
    %v1612 = vpop.permute.xlu0 %1611
    %1614 = vrot.lane.b32.xlu0 %v1594, 64
    %v1615 = vpop.permute.xlu0 %1614
    %1617 = vrot.lane.b32.xlu0 %v1594, 96
    %v1618 = vpop.permute.xlu0 %1617
    %v1620 = vsel %vm1605, %v1594, %v1612
    %v1621 = vsel %vm421, %v1620, %v1615
    %v1622 = vsel %vm1608, %v1621, %v1618
    %v1623 = vlaneseq
    %v1624 = vshrl.u32 %v1623, 7
    %v1625 = vsub.s32 0, %v1624
    %v1626 = vrot.slane %v1609, %v1625
    %v1627 = vmul.f32 %v1500, %v1626
    %v1628 = vmul.f32 %v1501, %v1626
    %v1629 = vmul.f32 %v1514, %v1626
    %v1630 = vmul.f32 %v1515, %v1626
    %v1631 = vlaneseq
    %v1632 = vshrl.u32 %v1631, 7
    %v1633 = vsub.s32 1, %v1632
    %v1634 = vrot.slane %v1622, %v1633
    %v1635 = vadd.f32 %v1627, %v1634
    %v1636 = vadd.f32 %v1628, %v1634
    %v1637 = vadd.f32 %v1629, %v1634
    %v1638 = vadd.f32 %v1630, %v1634
    %v1639 = vmax.f32 %v1635, 0.0
    %v1640 = vmax.f32 %v1636, 0.0
    %v1641 = vmax.f32 %v1637, 0.0
    %v1642 = vmax.f32 %v1638, 0.0
    %v1643 = vpack.c.bf16 %v1641, %v1639
    %v1644 = vpack.c.bf16 %v1642, %v1640
    %v1645 = vld [vmem:[#allocation6] sm:$0xff]
    %v1646 = vld [vmem:[#allocation6 + $0x8] sm:$0xff]
    %v1647 = vld [vmem:[#allocation6 + $0x10] sm:$0xff]
    %v1648 = vld [vmem:[#allocation6 + $0x18] sm:$0xff]
    %v1649 = vld [vmem:[#allocation6 + $0x20] sm:$0xff]
    %v1650 = vld [vmem:[#allocation6 + $0x28] sm:$0xff]
    %v1651 = vld [vmem:[#allocation6 + $0x30] sm:$0xff]
    %v1652 = vld [vmem:[#allocation6 + $0x38] sm:$0xff]
    %v1653 = vld [vmem:[#allocation6 + $0x40] sm:$0xff]
    %v1654 = vld [vmem:[#allocation6 + $0x48] sm:$0xff]
    %v1655 = vld [vmem:[#allocation6 + $0x50] sm:$0xff]
    %v1656 = vld [vmem:[#allocation6 + $0x58] sm:$0xff]
    %v1657 = vld [vmem:[#allocation6 + $0x60] sm:$0xff]
    %v1658 = vld [vmem:[#allocation6 + $0x68] sm:$0xff]
    %v1659 = vld [vmem:[#allocation6 + $0x70] sm:$0xff]
    %v1660 = vld [vmem:[#allocation6 + $0x78] sm:$0xff]
    %v1661 = vld [vmem:[#allocation6 + $0x80] sm:$0xff]
    %v1662 = vld [vmem:[#allocation6 + $0x88] sm:$0xff]
    %v1663 = vld [vmem:[#allocation6 + $0x90] sm:$0xff]
    %v1664 = vld [vmem:[#allocation6 + $0x98] sm:$0xff]
    %v1665 = vld [vmem:[#allocation6 + $0xa0] sm:$0xff]
    %v1666 = vld [vmem:[#allocation6 + $0xa8] sm:$0xff]
    %v1667 = vld [vmem:[#allocation6 + $0xb0] sm:$0xff]
    %v1668 = vld [vmem:[#allocation6 + $0xb8] sm:$0xff]
    %v1669 = vld [vmem:[#allocation6 + $0xc0] sm:$0xff]
    %v1670 = vld [vmem:[#allocation6 + $0xc8] sm:$0xff]
    %v1671 = vld [vmem:[#allocation6 + $0xd0] sm:$0xff]
    %v1672 = vld [vmem:[#allocation6 + $0xd8] sm:$0xff]
    %v1673 = vld [vmem:[#allocation6 + $0xe0] sm:$0xff]
    %v1674 = vld [vmem:[#allocation6 + $0xe8] sm:$0xff]
    %v1675 = vld [vmem:[#allocation6 + $0xf0] sm:$0xff]
    %v1676 = vld [vmem:[#allocation6 + $0xf8] sm:$0xff]
    %v1677 = vld [vmem:[#allocation6 + $0x100] sm:$0xff]
    %v1678 = vld [vmem:[#allocation6 + $0x108] sm:$0xff]
    %v1679 = vld [vmem:[#allocation6 + $0x110] sm:$0xff]
    %v1680 = vld [vmem:[#allocation6 + $0x118] sm:$0xff]
    %v1681 = vld [vmem:[#allocation6 + $0x120] sm:$0xff]
    %v1682 = vld [vmem:[#allocation6 + $0x128] sm:$0xff]
    %v1683 = vld [vmem:[#allocation6 + $0x130] sm:$0xff]
    %v1684 = vld [vmem:[#allocation6 + $0x138] sm:$0xff]
    %v1685 = vld [vmem:[#allocation6 + $0x140] sm:$0xff]
    %v1686 = vld [vmem:[#allocation6 + $0x148] sm:$0xff]
    %v1687 = vld [vmem:[#allocation6 + $0x150] sm:$0xff]
    %v1688 = vld [vmem:[#allocation6 + $0x158] sm:$0xff]
    %v1689 = vld [vmem:[#allocation6 + $0x160] sm:$0xff]
    %v1690 = vld [vmem:[#allocation6 + $0x168] sm:$0xff]
    %v1691 = vld [vmem:[#allocation6 + $0x170] sm:$0xff]
    %v1692 = vld [vmem:[#allocation6 + $0x178] sm:$0xff]
    %v1693 = vld [vmem:[#allocation6 + $0x180] sm:$0xff]
    %v1694 = vld [vmem:[#allocation6 + $0x188] sm:$0xff]
    %v1695 = vld [vmem:[#allocation6 + $0x190] sm:$0xff]
    %v1696 = vld [vmem:[#allocation6 + $0x198] sm:$0xff]
    %v1697 = vld [vmem:[#allocation6 + $0x1a0] sm:$0xff]
    %v1698 = vld [vmem:[#allocation6 + $0x1a8] sm:$0xff]
    %v1699 = vld [vmem:[#allocation6 + $0x1b0] sm:$0xff]
    %v1700 = vld [vmem:[#allocation6 + $0x1b8] sm:$0xff]
    %v1701 = vld [vmem:[#allocation6 + $0x1c0] sm:$0xff]
    %v1702 = vld [vmem:[#allocation6 + $0x1c8] sm:$0xff]
    %v1703 = vld [vmem:[#allocation6 + $0x1d0] sm:$0xff]
    %v1704 = vld [vmem:[#allocation6 + $0x1d8] sm:$0xff]
    %v1705 = vld [vmem:[#allocation6 + $0x1e0] sm:$0xff]
    %v1706 = vld [vmem:[#allocation6 + $0x1e8] sm:$0xff]
    %v1707 = vld [vmem:[#allocation6 + $0x1f0] sm:$0xff]
    %v1708 = vld [vmem:[#allocation6 + $0x1f8] sm:$0xff]
    %v1773 = vunpack.c.l.b16 %v1645
    %v1774 = vunpack.c.h.b16 %v1645
    %v1775 = vunpack.c.l.b16 %v1646
    %v1776 = vunpack.c.h.b16 %v1646
    %v1777 = vunpack.c.l.b16 %v1647
    %v1778 = vunpack.c.h.b16 %v1647
    %v1779 = vunpack.c.l.b16 %v1648
    %v1780 = vunpack.c.h.b16 %v1648
    %v1781 = vunpack.c.l.b16 %v1649
    %v1782 = vunpack.c.h.b16 %v1649
    %v1783 = vunpack.c.l.b16 %v1650
    %v1784 = vunpack.c.h.b16 %v1650
    %v1785 = vunpack.c.l.b16 %v1651
    %v1786 = vunpack.c.h.b16 %v1651
    %v1787 = vunpack.c.l.b16 %v1652
    %v1788 = vunpack.c.h.b16 %v1652
    %v1789 = vunpack.c.l.b16 %v1653
    %v1790 = vunpack.c.h.b16 %v1653
    %v1791 = vunpack.c.l.b16 %v1654
    %v1792 = vunpack.c.h.b16 %v1654
    %v1793 = vunpack.c.l.b16 %v1655
    %v1794 = vunpack.c.h.b16 %v1655
    %v1795 = vunpack.c.l.b16 %v1656
    %v1796 = vunpack.c.h.b16 %v1656
    %v1797 = vunpack.c.l.b16 %v1657
    %v1798 = vunpack.c.h.b16 %v1657
    %v1799 = vunpack.c.l.b16 %v1658
    %v1800 = vunpack.c.h.b16 %v1658
    %v1801 = vunpack.c.l.b16 %v1659
    %v1802 = vunpack.c.h.b16 %v1659
    %v1803 = vunpack.c.l.b16 %v1660
    %v1804 = vunpack.c.h.b16 %v1660
    %v1805 = vunpack.c.l.b16 %v1661
    %v1806 = vunpack.c.h.b16 %v1661
    %v1807 = vunpack.c.l.b16 %v1662
    %v1808 = vunpack.c.h.b16 %v1662
    %v1809 = vunpack.c.l.b16 %v1663
    %v1810 = vunpack.c.h.b16 %v1663
    %v1811 = vunpack.c.l.b16 %v1664
    %v1812 = vunpack.c.h.b16 %v1664
    %v1813 = vunpack.c.l.b16 %v1665
    %v1814 = vunpack.c.h.b16 %v1665
    %v1815 = vunpack.c.l.b16 %v1666
    %v1816 = vunpack.c.h.b16 %v1666
    %v1817 = vunpack.c.l.b16 %v1667
    %v1818 = vunpack.c.h.b16 %v1667
    %v1819 = vunpack.c.l.b16 %v1668
    %v1820 = vunpack.c.h.b16 %v1668
    %v1821 = vunpack.c.l.b16 %v1669
    %v1822 = vunpack.c.h.b16 %v1669
    %v1823 = vunpack.c.l.b16 %v1670
    %v1824 = vunpack.c.h.b16 %v1670
    %v1825 = vunpack.c.l.b16 %v1671
    %v1826 = vunpack.c.h.b16 %v1671
    %v1827 = vunpack.c.l.b16 %v1672
    %v1828 = vunpack.c.h.b16 %v1672
    %v1829 = vunpack.c.l.b16 %v1673
    %v1830 = vunpack.c.h.b16 %v1673
    %v1831 = vunpack.c.l.b16 %v1674
    %v1832 = vunpack.c.h.b16 %v1674
    %v1833 = vunpack.c.l.b16 %v1675
    %v1834 = vunpack.c.h.b16 %v1675
    %v1835 = vunpack.c.l.b16 %v1676
    %v1836 = vunpack.c.h.b16 %v1676
    %v1837 = vunpack.c.l.b16 %v1677
    %v1838 = vunpack.c.h.b16 %v1677
    %v1839 = vunpack.c.l.b16 %v1678
    %v1840 = vunpack.c.h.b16 %v1678
    %v1841 = vunpack.c.l.b16 %v1679
    %v1842 = vunpack.c.h.b16 %v1679
    %v1843 = vunpack.c.l.b16 %v1680
    %v1844 = vunpack.c.h.b16 %v1680
    %v1845 = vunpack.c.l.b16 %v1681
    %v1846 = vunpack.c.h.b16 %v1681
    %v1847 = vunpack.c.l.b16 %v1682
    %v1848 = vunpack.c.h.b16 %v1682
    %v1849 = vunpack.c.l.b16 %v1683
    %v1850 = vunpack.c.h.b16 %v1683
    %v1851 = vunpack.c.l.b16 %v1684
    %v1852 = vunpack.c.h.b16 %v1684
    %v1853 = vunpack.c.l.b16 %v1685
    %v1854 = vunpack.c.h.b16 %v1685
    %v1855 = vunpack.c.l.b16 %v1686
    %v1856 = vunpack.c.h.b16 %v1686
    %v1857 = vunpack.c.l.b16 %v1687
    %v1858 = vunpack.c.h.b16 %v1687
    %v1859 = vunpack.c.l.b16 %v1688
    %v1860 = vunpack.c.h.b16 %v1688
    %v1861 = vunpack.c.l.b16 %v1689
    %v1862 = vunpack.c.h.b16 %v1689
    %v1863 = vunpack.c.l.b16 %v1690
    %v1864 = vunpack.c.h.b16 %v1690
    %v1865 = vunpack.c.l.b16 %v1691
    %v1866 = vunpack.c.h.b16 %v1691
    %v1867 = vunpack.c.l.b16 %v1692
    %v1868 = vunpack.c.h.b16 %v1692
    %v1869 = vunpack.c.l.b16 %v1693
    %v1870 = vunpack.c.h.b16 %v1693
    %v1871 = vunpack.c.l.b16 %v1694
    %v1872 = vunpack.c.h.b16 %v1694
    %v1873 = vunpack.c.l.b16 %v1695
    %v1874 = vunpack.c.h.b16 %v1695
    %v1875 = vunpack.c.l.b16 %v1696
    %v1876 = vunpack.c.h.b16 %v1696
    %v1877 = vunpack.c.l.b16 %v1697
    %v1878 = vunpack.c.h.b16 %v1697
    %v1879 = vunpack.c.l.b16 %v1698
    %v1880 = vunpack.c.h.b16 %v1698
    %v1881 = vunpack.c.l.b16 %v1699
    %v1882 = vunpack.c.h.b16 %v1699
    %v1883 = vunpack.c.l.b16 %v1700
    %v1884 = vunpack.c.h.b16 %v1700
    %v1885 = vunpack.c.l.b16 %v1701
    %v1886 = vunpack.c.h.b16 %v1701
    %v1887 = vunpack.c.l.b16 %v1702
    %v1888 = vunpack.c.h.b16 %v1702
    %v1889 = vunpack.c.l.b16 %v1703
    %v1890 = vunpack.c.h.b16 %v1703
    %v1891 = vunpack.c.l.b16 %v1704
    %v1892 = vunpack.c.h.b16 %v1704
    %v1893 = vunpack.c.l.b16 %v1705
    %v1894 = vunpack.c.h.b16 %v1705
    %v1895 = vunpack.c.l.b16 %v1706
    %v1896 = vunpack.c.h.b16 %v1706
    %v1897 = vunpack.c.l.b16 %v1707
    %v1898 = vunpack.c.h.b16 %v1707
    %v1899 = vunpack.c.l.b16 %v1708
    %v1900 = vunpack.c.h.b16 %v1708
    %v1901 = vpack.c.b16 %v1777, %v1773
    %v1902 = vpack.c.b16 %v1778, %v1774
    %v1903 = vpack.c.b16 %v1779, %v1775
    %v1904 = vpack.c.b16 %v1780, %v1776
    %v1905 = vpack.c.b16 %v1785, %v1781
    %v1906 = vpack.c.b16 %v1786, %v1782
    %v1907 = vpack.c.b16 %v1787, %v1783
    %v1908 = vpack.c.b16 %v1788, %v1784
    %v1909 = vpack.c.b16 %v1793, %v1789
    %v1910 = vpack.c.b16 %v1794, %v1790
    %v1911 = vpack.c.b16 %v1795, %v1791
    %v1912 = vpack.c.b16 %v1796, %v1792
    %v1913 = vpack.c.b16 %v1801, %v1797
    %v1914 = vpack.c.b16 %v1802, %v1798
    %v1915 = vpack.c.b16 %v1803, %v1799
    %v1916 = vpack.c.b16 %v1804, %v1800
    %v1917 = vpack.c.b16 %v1809, %v1805
    %v1918 = vpack.c.b16 %v1810, %v1806
    %v1919 = vpack.c.b16 %v1811, %v1807
    %v1920 = vpack.c.b16 %v1812, %v1808
    %v1921 = vpack.c.b16 %v1817, %v1813
    %v1922 = vpack.c.b16 %v1818, %v1814
    %v1923 = vpack.c.b16 %v1819, %v1815
    %v1924 = vpack.c.b16 %v1820, %v1816
    %v1925 = vpack.c.b16 %v1825, %v1821
    %v1926 = vpack.c.b16 %v1826, %v1822
    %v1927 = vpack.c.b16 %v1827, %v1823
    %v1928 = vpack.c.b16 %v1828, %v1824
    %v1929 = vpack.c.b16 %v1833, %v1829
    %v1930 = vpack.c.b16 %v1834, %v1830
    %v1931 = vpack.c.b16 %v1835, %v1831
    %v1932 = vpack.c.b16 %v1836, %v1832
    %v1933 = vpack.c.b16 %v1841, %v1837
    %v1934 = vpack.c.b16 %v1842, %v1838
    %v1935 = vpack.c.b16 %v1843, %v1839
    %v1936 = vpack.c.b16 %v1844, %v1840
    %v1937 = vpack.c.b16 %v1849, %v1845
    %v1938 = vpack.c.b16 %v1850, %v1846
    %v1939 = vpack.c.b16 %v1851, %v1847
    %v1940 = vpack.c.b16 %v1852, %v1848
    %v1941 = vpack.c.b16 %v1857, %v1853
    %v1942 = vpack.c.b16 %v1858, %v1854
    %v1943 = vpack.c.b16 %v1859, %v1855
    %v1944 = vpack.c.b16 %v1860, %v1856
    %v1945 = vpack.c.b16 %v1865, %v1861
    %v1946 = vpack.c.b16 %v1866, %v1862
    %v1947 = vpack.c.b16 %v1867, %v1863
    %v1948 = vpack.c.b16 %v1868, %v1864
    %v1949 = vpack.c.b16 %v1873, %v1869
    %v1950 = vpack.c.b16 %v1874, %v1870
    %v1951 = vpack.c.b16 %v1875, %v1871
    %v1952 = vpack.c.b16 %v1876, %v1872
    %v1953 = vpack.c.b16 %v1881, %v1877
    %v1954 = vpack.c.b16 %v1882, %v1878
    %v1955 = vpack.c.b16 %v1883, %v1879
    %v1956 = vpack.c.b16 %v1884, %v1880
    %v1957 = vpack.c.b16 %v1889, %v1885
    %v1958 = vpack.c.b16 %v1890, %v1886
    %v1959 = vpack.c.b16 %v1891, %v1887
    %v1960 = vpack.c.b16 %v1892, %v1888
    %v1961 = vpack.c.b16 %v1897, %v1893
    %v1962 = vpack.c.b16 %v1898, %v1894
    %v1963 = vpack.c.b16 %v1899, %v1895
    %v1964 = vpack.c.b16 %v1900, %v1896
    %2029 = vmatprep.subr.bf16.mxu0 %v1902
    %2030 = vmatpush1.bf16.msra.mxu0 %v1901
    %2031 = vmatprep.subr.bf16.mxu0 %v1906
    %2032 = vmatpush1.bf16.msra.mxu0 %v1905
    %2033 = vmatprep.subr.bf16.mxu0 %v1910
    %2034 = vmatpush1.bf16.msra.mxu0 %v1909
    %2035 = vmatprep.subr.bf16.mxu0 %v1914
    %2036 = vmatpush1.bf16.msra.mxu0 %v1913
    %2037 = vmatprep.subr.bf16.mxu0 %v1918
    %2038 = vmatpush1.bf16.msra.mxu0 %v1917
    %2039 = vmatprep.subr.bf16.mxu0 %v1922
    %2040 = vmatpush1.bf16.msra.mxu0 %v1921
    %2041 = vmatprep.subr.bf16.mxu0 %v1926
    %2042 = vmatpush1.bf16.msra.mxu0 %v1925
    %2043 = vmatprep.subr.bf16.mxu0 %v1930
    %2044 = vmatpush1.bf16.msra.mxu0 %v1929
    %2045 = vmatprep.subr.bf16.mxu0 %v1934
    %2046 = vmatpush1.bf16.msra.mxu0 %v1933
    %2047 = vmatprep.subr.bf16.mxu0 %v1938
    %2048 = vmatpush1.bf16.msra.mxu0 %v1937
    %2049 = vmatprep.subr.bf16.mxu0 %v1942
    %2050 = vmatpush1.bf16.msra.mxu0 %v1941
    %2051 = vmatprep.subr.bf16.mxu0 %v1946
    %2052 = vmatpush1.bf16.msra.mxu0 %v1945
    %2053 = vmatprep.subr.bf16.mxu0 %v1950
    %2054 = vmatpush1.bf16.msra.mxu0 %v1949
    %2055 = vmatprep.subr.bf16.mxu0 %v1954
    %2056 = vmatpush1.bf16.msra.mxu0 %v1953
    %2057 = vmatprep.subr.bf16.mxu0 %v1958
    %2058 = vmatpush1.bf16.msra.mxu0 %v1957
    %2059 = vmatprep.subr.bf16.mxu0 %v1962
    %2060 = vmatpush1.bf16.msra.mxu0 %v1961
    %2061 = vmatprep.mubr.bf16.mxu0 %v1644
    %2062 = vmatmul.mubr.bf16.gmra.mrb[0].mxu0 %v1643
    %v2063 = vpop.f32.mrb[0].mxu0
    %v2064 = vadd.f32 0.0, %v2063
    %v2065 = vpop.f32.mrb[0].mxu0
    %v2066 = vadd.f32 0.0, %v2065
    %v2067 = vpop.f32.mrb[0].mxu0
    %v2068 = vadd.f32 0.0, %v2067
    %v2069 = vpop.f32.mrb[0].mxu0
    %v2070 = vadd.f32 0.0, %v2069
    %2071 = vdwg.mxu0
    %2072 = vmatprep.subr.bf16.mxu0 %v1904
    %2073 = vmatpush1.bf16.msra.mxu0 %v1903
    %2074 = vmatprep.subr.bf16.mxu0 %v1908
    %2075 = vmatpush1.bf16.msra.mxu0 %v1907
    %2076 = vmatprep.subr.bf16.mxu0 %v1912
    %2077 = vmatpush1.bf16.msra.mxu0 %v1911
    %2078 = vmatprep.subr.bf16.mxu0 %v1916
    %2079 = vmatpush1.bf16.msra.mxu0 %v1915
    %2080 = vmatprep.subr.bf16.mxu0 %v1920
    %2081 = vmatpush1.bf16.msra.mxu0 %v1919
    %2082 = vmatprep.subr.bf16.mxu0 %v1924
    %2083 = vmatpush1.bf16.msra.mxu0 %v1923
    %2084 = vmatprep.subr.bf16.mxu0 %v1928
    %2085 = vmatpush1.bf16.msra.mxu0 %v1927
    %2086 = vmatprep.subr.bf16.mxu0 %v1932
    %2087 = vmatpush1.bf16.msra.mxu0 %v1931
    %2088 = vmatprep.subr.bf16.mxu0 %v1936
    %2089 = vmatpush1.bf16.msra.mxu0 %v1935
    %2090 = vmatprep.subr.bf16.mxu0 %v1940
    %2091 = vmatpush1.bf16.msra.mxu0 %v1939
    %2092 = vmatprep.subr.bf16.mxu0 %v1944
    %2093 = vmatpush1.bf16.msra.mxu0 %v1943
    %2094 = vmatprep.subr.bf16.mxu0 %v1948
    %2095 = vmatpush1.bf16.msra.mxu0 %v1947
    %2096 = vmatprep.subr.bf16.mxu0 %v1952
    %2097 = vmatpush1.bf16.msra.mxu0 %v1951
    %2098 = vmatprep.subr.bf16.mxu0 %v1956
    %2099 = vmatpush1.bf16.msra.mxu0 %v1955
    %2100 = vmatprep.subr.bf16.mxu0 %v1960
    %2101 = vmatpush1.bf16.msra.mxu0 %v1959
    %2102 = vmatprep.subr.bf16.mxu0 %v1964
    %2103 = vmatpush1.bf16.msra.mxu0 %v1963
    %2104 = vmatprep.mubr.bf16.mxu0 %v1644
    %2105 = vmatmul.mubr.bf16.gmra.mrb[0].mxu0 %v1643
    %v2106 = vpop.f32.mrb[0].mxu0
    %v2107 = vadd.f32 0.0, %v2106
    %v2108 = vpop.f32.mrb[0].mxu0
    %v2109 = vadd.f32 0.0, %v2108
    %v2110 = vpop.f32.mrb[0].mxu0
    %v2111 = vadd.f32 0.0, %v2110
    %v2112 = vpop.f32.mrb[0].mxu0
    %v2113 = vadd.f32 0.0, %v2112
    %2114 = vdwg.mxu0
    %v2116 = vrot.slane %v2109, 7
    %v2118 = vsel %vm339, 0.0, %v2116
    %v2119 = vadd.f32 %v2066, %v2118
    %v2121 = vrot.slane %v2064, 1
    %v2123 = vsel %vm357, %v2121, 0.0
    %v2124 = vadd.f32 %v2107, %v2123
    %v2126 = vrot.slane %v2113, 7
    %v2128 = vsel %vm339, 0.0, %v2126
    %v2129 = vadd.f32 %v2070, %v2128
    %v2131 = vrot.slane %v2068, 1
    %v2133 = vsel %vm357, %v2131, 0.0
    %v2134 = vadd.f32 %v2111, %v2133
    %v2136 = vrot.slane %v2124, 7
    %v2139 = vrot.slane %v2119, 7
    %v2141 = vrot.slane %v2124, 6
    %v2143 = vrot.slane %v2119, 6
    %v2145 = vrot.slane %v2124, 5
    %v2147 = vrot.slane %v2119, 5
    %v2149 = vrot.slane %v2124, 4
    %v2151 = vrot.slane %v2119, 4
    %v2153 = vrot.slane %v2124, 3
    %v2155 = vrot.slane %v2119, 3
    %v2157 = vrot.slane %v2124, 2
    %v2159 = vrot.slane %v2119, 2
    %v2161 = vrot.slane %v2124, 1
    %v2163 = vrot.slane %v2119, 1
    %v2165 = vsel %vm339, %v2119, %v2136
    %v2166 = vsel %vm342, %v2165, %v2139
    %v2167 = vsel %vm345, %v2166, %v2141
    %v2168 = vsel %vm348, %v2167, %v2143
    %v2169 = vsel %vm351, %v2168, %v2145
    %v2170 = vsel %vm354, %v2169, %v2147
    %v2171 = vsel %vm357, %v2170, %v2149
    %v2172 = vsel %vm339, %v2151, %v2153
    %v2173 = vsel %vm342, %v2172, %v2155
    %v2174 = vsel %vm345, %v2173, %v2157
    %v2175 = vsel %vm348, %v2174, %v2159
    %v2176 = vsel %vm351, %v2175, %v2161
    %v2177 = vsel %vm354, %v2176, %v2163
    %v2178 = vsel %vm357, %v2177, %v2124
    %v2180 = vrot.slane %v2134, 7
    %v2183 = vrot.slane %v2129, 7
    %v2185 = vrot.slane %v2134, 6
    %v2187 = vrot.slane %v2129, 6
    %v2189 = vrot.slane %v2134, 5
    %v2191 = vrot.slane %v2129, 5
    %v2193 = vrot.slane %v2134, 4
    %v2195 = vrot.slane %v2129, 4
    %v2197 = vrot.slane %v2134, 3
    %v2199 = vrot.slane %v2129, 3
    %v2201 = vrot.slane %v2134, 2
    %v2203 = vrot.slane %v2129, 2
    %v2205 = vrot.slane %v2134, 1
    %v2207 = vrot.slane %v2129, 1
    %v2209 = vsel %vm339, %v2129, %v2180
    %v2210 = vsel %vm342, %v2209, %v2183
    %v2211 = vsel %vm345, %v2210, %v2185
    %v2212 = vsel %vm348, %v2211, %v2187
    %v2213 = vsel %vm351, %v2212, %v2189
    %v2214 = vsel %vm354, %v2213, %v2191
    %v2215 = vsel %vm357, %v2214, %v2193
    %v2216 = vsel %vm339, %v2195, %v2197
    %v2217 = vsel %vm342, %v2216, %v2199
    %v2218 = vsel %vm345, %v2217, %v2201
    %v2219 = vsel %vm348, %v2218, %v2203
    %v2220 = vsel %vm351, %v2219, %v2205
    %v2221 = vsel %vm354, %v2220, %v2207
    %v2222 = vsel %vm357, %v2221, %v2134
    %v2223 = vld [vmem:[%s7] sm:$0x3]
    %v2224 = vadd.f32 %v2171, %v2178
    %v2225 = vadd.f32 %v2224, %v2215
    %v2226 = vadd.f32 %v2225, %v2222
    %v2227 = vrot.slane %v2226, 4
    %v2228 = vadd.f32 %v2226, %v2227
    %v2229 = vrot.slane %v2228, 2
    %v2230 = vadd.f32 %v2228, %v2229
    %v2231 = vrot.slane %v2230, 1
    %v2232 = vadd.f32 %v2230, %v2231
    %v2233 = vmul.f32 %v2171, %v2171
    %v2234 = vmul.f32 %v2178, %v2178
    %v2235 = vmul.f32 %v2215, %v2215
    %v2236 = vmul.f32 %v2222, %v2222
    %v2237 = vadd.f32 %v2233, %v2234
    %v2238 = vadd.f32 %v2237, %v2235
    %v2239 = vadd.f32 %v2238, %v2236
    %v2240 = vrot.slane %v2239, 4
    %v2241 = vadd.f32 %v2239, %v2240
    %v2242 = vrot.slane %v2241, 2
    %v2243 = vadd.f32 %v2241, %v2242
    %v2244 = vrot.slane %v2243, 1
    %v2245 = vadd.f32 %v2243, %v2244
    %v2246 = vsel %vm339, %v2232, %v2245
    %2248 = vrot.lane.b32.xlu0 %v2246, 120
    %v2249 = vpop.permute.xlu0 %2248
    %v2251 = vadd.f32 %v2246, %v2249
    %2252 = vrot.lane.b32.xlu0 %v2246, 112
    %v2253 = vpop.permute.xlu0 %2252
    %v2255 = vadd.f32 %v2251, %v2253
    %2256 = vrot.lane.b32.xlu0 %v2246, 104
    %v2257 = vpop.permute.xlu0 %2256
    %v2259 = vadd.f32 %v2255, %v2257
    %2260 = vrot.lane.b32.xlu0 %v2246, 96
    %v2261 = vpop.permute.xlu0 %2260
    %v2263 = vadd.f32 %v2259, %v2261
    %2264 = vrot.lane.b32.xlu0 %v2246, 88
    %v2265 = vpop.permute.xlu0 %2264
    %v2267 = vadd.f32 %v2263, %v2265
    %2268 = vrot.lane.b32.xlu0 %v2246, 80
    %v2269 = vpop.permute.xlu0 %2268
    %v2271 = vadd.f32 %v2267, %v2269
    %2272 = vrot.lane.b32.xlu0 %v2246, 72
    %v2273 = vpop.permute.xlu0 %2272
    %v2275 = vadd.f32 %v2271, %v2273
    %2276 = vrot.lane.b32.xlu0 %v2246, 64
    %v2277 = vpop.permute.xlu0 %2276
    %v2279 = vadd.f32 %v2275, %v2277
    %2280 = vrot.lane.b32.xlu0 %v2246, 56
    %v2281 = vpop.permute.xlu0 %2280
    %v2283 = vadd.f32 %v2279, %v2281
    %2284 = vrot.lane.b32.xlu0 %v2246, 48
    %v2285 = vpop.permute.xlu0 %2284
    %v2287 = vadd.f32 %v2283, %v2285
    %2288 = vrot.lane.b32.xlu0 %v2246, 40
    %v2289 = vpop.permute.xlu0 %2288
    %v2291 = vadd.f32 %v2287, %v2289
    %2292 = vrot.lane.b32.xlu0 %v2246, 32
    %v2293 = vpop.permute.xlu0 %2292
    %v2295 = vadd.f32 %v2291, %v2293
    %2296 = vrot.lane.b32.xlu0 %v2246, 24
    %v2297 = vpop.permute.xlu0 %2296
    %v2299 = vadd.f32 %v2295, %v2297
    %2300 = vrot.lane.b32.xlu0 %v2246, 16
    %v2301 = vpop.permute.xlu0 %2300
    %v2303 = vadd.f32 %v2299, %v2301
    %2304 = vrot.lane.b32.xlu0 %v2246, 8
    %v2305 = vpop.permute.xlu0 %2304
    %v2307 = vadd.f32 %v2303, %v2305
    %v2308 = vmul.f32 %v2307, 0.001953125
    %v2309 = vmul.f32 %v2308, %v2308
    %v2311 = vrot.slane %v2309, 7
    %v2313 = vsub.f32 %v2308, %v2311
    %v2314 = vadd.f32 %v2313, 1e-05
    %v2315 = vrsqrt.pop %v2314
    %v2317 = vrot.slane %v2315, 1
    %v2319 = vmul.f32 %v2223, %v2317
    %v2320 = vmul.f32 %v2308, %v2319
    %v2322 = vrot.slane %v2320, 7
    %v2324 = vsub.f32 %v2223, %v2322
    %2326 = vrot.lane.b32.xlu0 %v2319, 8
    %v2327 = vpop.permute.xlu0 %2326
    %2329 = vrot.lane.b32.xlu0 %v2319, 16
    %v2330 = vpop.permute.xlu0 %2329
    %2332 = vrot.lane.b32.xlu0 %v2319, 24
    %v2333 = vpop.permute.xlu0 %2332
    %2335 = vrot.lane.b32.xlu0 %v2319, 32
    %v2336 = vpop.permute.xlu0 %2335
    %2338 = vrot.lane.b32.xlu0 %v2319, 40
    %v2339 = vpop.permute.xlu0 %2338
    %2341 = vrot.lane.b32.xlu0 %v2319, 48
    %v2342 = vpop.permute.xlu0 %2341
    %2344 = vrot.lane.b32.xlu0 %v2319, 56
    %v2345 = vpop.permute.xlu0 %2344
    %2347 = vrot.lane.b32.xlu0 %v2319, 64
    %v2348 = vpop.permute.xlu0 %2347
    %2350 = vrot.lane.b32.xlu0 %v2319, 72
    %v2351 = vpop.permute.xlu0 %2350
    %2353 = vrot.lane.b32.xlu0 %v2319, 80
    %v2354 = vpop.permute.xlu0 %2353
    %2356 = vrot.lane.b32.xlu0 %v2319, 88
    %v2357 = vpop.permute.xlu0 %2356
    %2359 = vrot.lane.b32.xlu0 %v2319, 96
    %v2360 = vpop.permute.xlu0 %2359
    %2362 = vrot.lane.b32.xlu0 %v2319, 104
    %v2363 = vpop.permute.xlu0 %2362
    %2365 = vrot.lane.b32.xlu0 %v2319, 112
    %v2366 = vpop.permute.xlu0 %2365
    %2368 = vrot.lane.b32.xlu0 %v2319, 120
    %v2369 = vpop.permute.xlu0 %2368
    %vm2371 = vcmask 64512
    %v2372 = vsel %vm2371, %v2319, %v2327
    %v2373 = vsel %vm135, %v2372, %v2330
    %vm2374 = vcmask 195584
    %v2375 = vsel %vm2374, %v2373, %v2333
    %v2376 = vsel %vm1605, %v2375, %v2336
    %vm2377 = vcmask 326656
    %v2378 = vsel %vm2377, %v2376, %v2339
    %vm2379 = vcmask 392192
    %v2380 = vsel %vm2379, %v2378, %v2342
    %vm2381 = vcmask 457728
    %v2382 = vsel %vm2381, %v2380, %v2345
    %v2383 = vsel %vm421, %v2382, %v2348
    %vm2384 = vcmask 588800
    %v2385 = vsel %vm2384, %v2383, %v2351
    %vm2386 = vcmask 654336
    %v2387 = vsel %vm2386, %v2385, %v2354
    %vm2388 = vcmask 719872
    %v2389 = vsel %vm2388, %v2387, %v2357
    %v2390 = vsel %vm1608, %v2389, %v2360
    %vm2391 = vcmask 850944
    %v2392 = vsel %vm2391, %v2390, %v2363
    %vm2393 = vcmask 916480
    %v2394 = vsel %vm2393, %v2392, %v2366
    %vm2395 = vcmask 982016
    %v2396 = vsel %vm2395, %v2394, %v2369
    %2398 = vrot.lane.b32.xlu0 %v2324, 8
    %v2399 = vpop.permute.xlu0 %2398
    %2401 = vrot.lane.b32.xlu0 %v2324, 16
    %v2402 = vpop.permute.xlu0 %2401
    %2404 = vrot.lane.b32.xlu0 %v2324, 24
    %v2405 = vpop.permute.xlu0 %2404
    %2407 = vrot.lane.b32.xlu0 %v2324, 32
    %v2408 = vpop.permute.xlu0 %2407
    %2410 = vrot.lane.b32.xlu0 %v2324, 40
    %v2411 = vpop.permute.xlu0 %2410
    %2413 = vrot.lane.b32.xlu0 %v2324, 48
    %v2414 = vpop.permute.xlu0 %2413
    %2416 = vrot.lane.b32.xlu0 %v2324, 56
    %v2417 = vpop.permute.xlu0 %2416
    %2419 = vrot.lane.b32.xlu0 %v2324, 64
    %v2420 = vpop.permute.xlu0 %2419
    %2422 = vrot.lane.b32.xlu0 %v2324, 72
    %v2423 = vpop.permute.xlu0 %2422
    %2425 = vrot.lane.b32.xlu0 %v2324, 80
    %v2426 = vpop.permute.xlu0 %2425
    %2428 = vrot.lane.b32.xlu0 %v2324, 88
    %v2429 = vpop.permute.xlu0 %2428
    %2431 = vrot.lane.b32.xlu0 %v2324, 96
    %v2432 = vpop.permute.xlu0 %2431
    %2434 = vrot.lane.b32.xlu0 %v2324, 104
    %v2435 = vpop.permute.xlu0 %2434
    %2437 = vrot.lane.b32.xlu0 %v2324, 112
    %v2438 = vpop.permute.xlu0 %2437
    %2440 = vrot.lane.b32.xlu0 %v2324, 120
    %v2441 = vpop.permute.xlu0 %2440
    %v2443 = vsel %vm2371, %v2324, %v2399
    %v2444 = vsel %vm135, %v2443, %v2402
    %v2445 = vsel %vm2374, %v2444, %v2405
    %v2446 = vsel %vm1605, %v2445, %v2408
    %v2447 = vsel %vm2377, %v2446, %v2411
    %v2448 = vsel %vm2379, %v2447, %v2414
    %v2449 = vsel %vm2381, %v2448, %v2417
    %v2450 = vsel %vm421, %v2449, %v2420
    %v2451 = vsel %vm2384, %v2450, %v2423
    %v2452 = vsel %vm2386, %v2451, %v2426
    %v2453 = vsel %vm2388, %v2452, %v2429
    %v2454 = vsel %vm1608, %v2453, %v2432
    %v2455 = vsel %vm2391, %v2454, %v2435
    %v2456 = vsel %vm2393, %v2455, %v2438
    %v2457 = vsel %vm2395, %v2456, %v2441
    %v2458 = vlaneseq
    %v2459 = vshrl.u32 %v2458, 7
    %v2460 = vsub.s32 0, %v2459
    %v2461 = vrot.slane %v2396, %v2460
    %v2462 = vmul.f32 %v2171, %v2461
    %v2463 = vmul.f32 %v2178, %v2461
    %v2464 = vmul.f32 %v2215, %v2461
    %v2465 = vmul.f32 %v2222, %v2461
    %v2466 = vlaneseq
    %v2467 = vshrl.u32 %v2466, 7
    %v2468 = vsub.s32 1, %v2467
    %v2469 = vrot.slane %v2457, %v2468
    %v2470 = vadd.f32 %v2462, %v2469
    %v2471 = vadd.f32 %v2463, %v2469
    %v2472 = vadd.f32 %v2464, %v2469
    %v2473 = vadd.f32 %v2465, %v2469
    %v2474 = vmax.f32 %v2470, 0.0
    %v2475 = vmax.f32 %v2471, 0.0
    %v2476 = vmax.f32 %v2472, 0.0
    %v2477 = vmax.f32 %v2473, 0.0
    %v2478 = vpack.c.bf16 %v2475, %v2474
    %v2479 = vpack.c.bf16 %v2477, %v2476
    %v2480 = vld [vmem:[#allocation7] sm:$0xff]
    %v2481 = vld [vmem:[#allocation7 + $0x8] sm:$0xff]
    %v2482 = vld [vmem:[#allocation7 + $0x10] sm:$0xff]
    %v2483 = vld [vmem:[#allocation7 + $0x18] sm:$0xff]
    %v2484 = vld [vmem:[#allocation7 + $0x20] sm:$0xff]
    %v2485 = vld [vmem:[#allocation7 + $0x28] sm:$0xff]
    %v2486 = vld [vmem:[#allocation7 + $0x30] sm:$0xff]
    %v2487 = vld [vmem:[#allocation7 + $0x38] sm:$0xff]
    %v2488 = vld [vmem:[#allocation7 + $0x40] sm:$0xff]
    %v2489 = vld [vmem:[#allocation7 + $0x48] sm:$0xff]
    %v2490 = vld [vmem:[#allocation7 + $0x50] sm:$0xff]
    %v2491 = vld [vmem:[#allocation7 + $0x58] sm:$0xff]
    %v2492 = vld [vmem:[#allocation7 + $0x60] sm:$0xff]
    %v2493 = vld [vmem:[#allocation7 + $0x68] sm:$0xff]
    %v2494 = vld [vmem:[#allocation7 + $0x70] sm:$0xff]
    %v2495 = vld [vmem:[#allocation7 + $0x78] sm:$0xff]
    %v2496 = vld [vmem:[#allocation7 + $0x80] sm:$0xff]
    %v2497 = vld [vmem:[#allocation7 + $0x88] sm:$0xff]
    %v2498 = vld [vmem:[#allocation7 + $0x90] sm:$0xff]
    %v2499 = vld [vmem:[#allocation7 + $0x98] sm:$0xff]
    %v2500 = vld [vmem:[#allocation7 + $0xa0] sm:$0xff]
    %v2501 = vld [vmem:[#allocation7 + $0xa8] sm:$0xff]
    %v2502 = vld [vmem:[#allocation7 + $0xb0] sm:$0xff]
    %v2503 = vld [vmem:[#allocation7 + $0xb8] sm:$0xff]
    %v2504 = vld [vmem:[#allocation7 + $0xc0] sm:$0xff]
    %v2505 = vld [vmem:[#allocation7 + $0xc8] sm:$0xff]
    %v2506 = vld [vmem:[#allocation7 + $0xd0] sm:$0xff]
    %v2507 = vld [vmem:[#allocation7 + $0xd8] sm:$0xff]
    %v2508 = vld [vmem:[#allocation7 + $0xe0] sm:$0xff]
    %v2509 = vld [vmem:[#allocation7 + $0xe8] sm:$0xff]
    %v2510 = vld [vmem:[#allocation7 + $0xf0] sm:$0xff]
    %v2511 = vld [vmem:[#allocation7 + $0xf8] sm:$0xff]
    %v2544 = vunpack.c.l.b16 %v2480
    %v2545 = vunpack.c.h.b16 %v2480
    %v2546 = vunpack.c.l.b16 %v2481
    %v2547 = vunpack.c.h.b16 %v2481
    %v2548 = vunpack.c.l.b16 %v2482
    %v2549 = vunpack.c.h.b16 %v2482
    %v2550 = vunpack.c.l.b16 %v2483
    %v2551 = vunpack.c.h.b16 %v2483
    %v2552 = vunpack.c.l.b16 %v2484
    %v2553 = vunpack.c.h.b16 %v2484
    %v2554 = vunpack.c.l.b16 %v2485
    %v2555 = vunpack.c.h.b16 %v2485
    %v2556 = vunpack.c.l.b16 %v2486
    %v2557 = vunpack.c.h.b16 %v2486
    %v2558 = vunpack.c.l.b16 %v2487
    %v2559 = vunpack.c.h.b16 %v2487
    %v2560 = vunpack.c.l.b16 %v2488
    %v2561 = vunpack.c.h.b16 %v2488
    %v2562 = vunpack.c.l.b16 %v2489
    %v2563 = vunpack.c.h.b16 %v2489
    %v2564 = vunpack.c.l.b16 %v2490
    %v2565 = vunpack.c.h.b16 %v2490
    %v2566 = vunpack.c.l.b16 %v2491
    %v2567 = vunpack.c.h.b16 %v2491
    %v2568 = vunpack.c.l.b16 %v2492
    %v2569 = vunpack.c.h.b16 %v2492
    %v2570 = vunpack.c.l.b16 %v2493
    %v2571 = vunpack.c.h.b16 %v2493
    %v2572 = vunpack.c.l.b16 %v2494
    %v2573 = vunpack.c.h.b16 %v2494
    %v2574 = vunpack.c.l.b16 %v2495
    %v2575 = vunpack.c.h.b16 %v2495
    %v2576 = vunpack.c.l.b16 %v2496
    %v2577 = vunpack.c.h.b16 %v2496
    %v2578 = vunpack.c.l.b16 %v2497
    %v2579 = vunpack.c.h.b16 %v2497
    %v2580 = vunpack.c.l.b16 %v2498
    %v2581 = vunpack.c.h.b16 %v2498
    %v2582 = vunpack.c.l.b16 %v2499
    %v2583 = vunpack.c.h.b16 %v2499
    %v2584 = vunpack.c.l.b16 %v2500
    %v2585 = vunpack.c.h.b16 %v2500
    %v2586 = vunpack.c.l.b16 %v2501
    %v2587 = vunpack.c.h.b16 %v2501
    %v2588 = vunpack.c.l.b16 %v2502
    %v2589 = vunpack.c.h.b16 %v2502
    %v2590 = vunpack.c.l.b16 %v2503
    %v2591 = vunpack.c.h.b16 %v2503
    %v2592 = vunpack.c.l.b16 %v2504
    %v2593 = vunpack.c.h.b16 %v2504
    %v2594 = vunpack.c.l.b16 %v2505
    %v2595 = vunpack.c.h.b16 %v2505
    %v2596 = vunpack.c.l.b16 %v2506
    %v2597 = vunpack.c.h.b16 %v2506
    %v2598 = vunpack.c.l.b16 %v2507
    %v2599 = vunpack.c.h.b16 %v2507
    %v2600 = vunpack.c.l.b16 %v2508
    %v2601 = vunpack.c.h.b16 %v2508
    %v2602 = vunpack.c.l.b16 %v2509
    %v2603 = vunpack.c.h.b16 %v2509
    %v2604 = vunpack.c.l.b16 %v2510
    %v2605 = vunpack.c.h.b16 %v2510
    %v2606 = vunpack.c.l.b16 %v2511
    %v2607 = vunpack.c.h.b16 %v2511
    %v2608 = vpack.c.b16 %v2548, %v2544
    %v2609 = vpack.c.b16 %v2549, %v2545
    %v2610 = vpack.c.b16 %v2550, %v2546
    %v2611 = vpack.c.b16 %v2551, %v2547
    %v2612 = vpack.c.b16 %v2556, %v2552
    %v2613 = vpack.c.b16 %v2557, %v2553
    %v2614 = vpack.c.b16 %v2558, %v2554
    %v2615 = vpack.c.b16 %v2559, %v2555
    %v2616 = vpack.c.b16 %v2564, %v2560
    %v2617 = vpack.c.b16 %v2565, %v2561
    %v2618 = vpack.c.b16 %v2566, %v2562
    %v2619 = vpack.c.b16 %v2567, %v2563
    %v2620 = vpack.c.b16 %v2572, %v2568
    %v2621 = vpack.c.b16 %v2573, %v2569
    %v2622 = vpack.c.b16 %v2574, %v2570
    %v2623 = vpack.c.b16 %v2575, %v2571
    %v2624 = vpack.c.b16 %v2580, %v2576
    %v2625 = vpack.c.b16 %v2581, %v2577
    %v2626 = vpack.c.b16 %v2582, %v2578
    %v2627 = vpack.c.b16 %v2583, %v2579
    %v2628 = vpack.c.b16 %v2588, %v2584
    %v2629 = vpack.c.b16 %v2589, %v2585
    %v2630 = vpack.c.b16 %v2590, %v2586
    %v2631 = vpack.c.b16 %v2591, %v2587
    %v2632 = vpack.c.b16 %v2596, %v2592
    %v2633 = vpack.c.b16 %v2597, %v2593
    %v2634 = vpack.c.b16 %v2598, %v2594
    %v2635 = vpack.c.b16 %v2599, %v2595
    %v2636 = vpack.c.b16 %v2604, %v2600
    %v2637 = vpack.c.b16 %v2605, %v2601
    %v2638 = vpack.c.b16 %v2606, %v2602
    %v2639 = vpack.c.b16 %v2607, %v2603
    %2672 = vmatprep.subr.bf16.mxu0 %v2609
    %2673 = vmatpush1.bf16.msra.mxu0 %v2608
    %2674 = vmatprep.subr.bf16.mxu0 %v2613
    %2675 = vmatpush1.bf16.msra.mxu0 %v2612
    %2676 = vmatprep.subr.bf16.mxu0 %v2617
    %2677 = vmatpush1.bf16.msra.mxu0 %v2616
    %2678 = vmatprep.subr.bf16.mxu0 %v2621
    %2679 = vmatpush1.bf16.msra.mxu0 %v2620
    %2680 = vmatprep.subr.bf16.mxu0 %v2625
    %2681 = vmatpush1.bf16.msra.mxu0 %v2624
    %2682 = vmatprep.subr.bf16.mxu0 %v2629
    %2683 = vmatpush1.bf16.msra.mxu0 %v2628
    %2684 = vmatprep.subr.bf16.mxu0 %v2633
    %2685 = vmatpush1.bf16.msra.mxu0 %v2632
    %2686 = vmatprep.subr.bf16.mxu0 %v2637
    %2687 = vmatpush1.bf16.msra.mxu0 %v2636
    %2688 = vmatprep.subr.bf16.mxu0 0
    %2689 = vmatpush1.bf16.msra.mxu0 0
    %2690 = vmatprep.subr.bf16.mxu0 0
    %2691 = vmatpush1.bf16.msra.mxu0 0
    %2692 = vmatprep.subr.bf16.mxu0 0
    %2693 = vmatpush1.bf16.msra.mxu0 0
    %2694 = vmatprep.subr.bf16.mxu0 0
    %2695 = vmatpush1.bf16.msra.mxu0 0
    %2696 = vmatprep.subr.bf16.mxu0 0
    %2697 = vmatpush1.bf16.msra.mxu0 0
    %2698 = vmatprep.subr.bf16.mxu0 0
    %2699 = vmatpush1.bf16.msra.mxu0 0
    %2700 = vmatprep.subr.bf16.mxu0 0
    %2701 = vmatpush1.bf16.msra.mxu0 0
    %2702 = vmatprep.subr.bf16.mxu0 0
    %2703 = vmatpush1.bf16.msra.mxu0 0
    %2704 = vmatprep.mubr.bf16.mxu0 0
    %2705 = vmatmul.mubr.bf16.gmra.mrb[0].mxu0 %v2478
    %v2706 = vpop.f32.mrb[0].mxu0
    %v2707 = vadd.f32 0.0, %v2706
    %v2708 = vpop.f32.mrb[0].mxu0
    %v2709 = vadd.f32 0.0, %v2708
    %v2710 = vpop.f32.mrb[0].mxu0
    %v2711 = vadd.f32 0.0, %v2710
    %v2712 = vpop.f32.mrb[0].mxu0
    %v2713 = vadd.f32 0.0, %v2712
    %2714 = vmatprep.mubr.bf16.mxu0 0
    %2715 = vmatmul.mubr.bf16.gmra.mrb[0].mxu0 %v2479
    %v2716 = vpop.f32.mrb[0].mxu0
    %v2717 = vadd.f32 0.0, %v2716
    %v2718 = vpop.f32.mrb[0].mxu0
    %v2719 = vadd.f32 0.0, %v2718
    %v2720 = vpop.f32.mrb[0].mxu0
    %v2721 = vadd.f32 0.0, %v2720
    %v2722 = vpop.f32.mrb[0].mxu0
    %v2723 = vadd.f32 0.0, %v2722
    %2724 = vdwg.mxu0
    %2725 = vmatprep.subr.bf16.mxu0 %v2611
    %2726 = vmatpush1.bf16.msra.mxu0 %v2610
    %2727 = vmatprep.subr.bf16.mxu0 %v2615
    %2728 = vmatpush1.bf16.msra.mxu0 %v2614
    %2729 = vmatprep.subr.bf16.mxu0 %v2619
    %2730 = vmatpush1.bf16.msra.mxu0 %v2618
    %2731 = vmatprep.subr.bf16.mxu0 %v2623
    %2732 = vmatpush1.bf16.msra.mxu0 %v2622
    %2733 = vmatprep.subr.bf16.mxu0 %v2627
    %2734 = vmatpush1.bf16.msra.mxu0 %v2626
    %2735 = vmatprep.subr.bf16.mxu0 %v2631
    %2736 = vmatpush1.bf16.msra.mxu0 %v2630
    %2737 = vmatprep.subr.bf16.mxu0 %v2635
    %2738 = vmatpush1.bf16.msra.mxu0 %v2634
    %2739 = vmatprep.subr.bf16.mxu0 %v2639
    %2740 = vmatpush1.bf16.msra.mxu0 %v2638
    %2741 = vmatprep.subr.bf16.mxu0 0
    %2742 = vmatpush1.bf16.msra.mxu0 0
    %2743 = vmatprep.subr.bf16.mxu0 0
    %2744 = vmatpush1.bf16.msra.mxu0 0
    %2745 = vmatprep.subr.bf16.mxu0 0
    %2746 = vmatpush1.bf16.msra.mxu0 0
    %2747 = vmatprep.subr.bf16.mxu0 0
    %2748 = vmatpush1.bf16.msra.mxu0 0
    %2749 = vmatprep.subr.bf16.mxu0 0
    %2750 = vmatpush1.bf16.msra.mxu0 0
    %2751 = vmatprep.subr.bf16.mxu0 0
    %2752 = vmatpush1.bf16.msra.mxu0 0
    %2753 = vmatprep.subr.bf16.mxu0 0
    %2754 = vmatpush1.bf16.msra.mxu0 0
    %2755 = vmatprep.subr.bf16.mxu0 0
    %2756 = vmatpush1.bf16.msra.mxu0 0
    %2757 = vmatprep.mubr.bf16.mxu0 0
    %2758 = vmatmul.mubr.bf16.gmra.mrb[0].mxu0 %v2478
    %v2759 = vpop.f32.mrb[0].mxu0
    %v2760 = vadd.f32 0.0, %v2759
    %v2761 = vpop.f32.mrb[0].mxu0
    %v2762 = vadd.f32 0.0, %v2761
    %v2763 = vpop.f32.mrb[0].mxu0
    %v2764 = vadd.f32 0.0, %v2763
    %v2765 = vpop.f32.mrb[0].mxu0
    %v2766 = vadd.f32 0.0, %v2765
    %2767 = vmatprep.mubr.bf16.mxu0 0
    %2768 = vmatmul.mubr.bf16.gmra.mrb[0].mxu0 %v2479
    %v2769 = vpop.f32.mrb[0].mxu0
    %v2770 = vadd.f32 0.0, %v2769
    %v2771 = vpop.f32.mrb[0].mxu0
    %v2772 = vadd.f32 0.0, %v2771
    %v2773 = vpop.f32.mrb[0].mxu0
    %v2774 = vadd.f32 0.0, %v2773
    %v2775 = vpop.f32.mrb[0].mxu0
    %v2776 = vadd.f32 0.0, %v2775
    %2777 = vdwg.mxu0
    %v2780 = vrot.slane %v2762, 7
    %v2781 = vrot.slane %v2766, 7
    %v2782 = vsel %vm339, %v2780, %v2781
    %v2785 = vsel %vm339, 0.0, %v2780
    %v2786 = vadd.f32 %v2709, %v2785
    %v2787 = vadd.f32 %v2713, %v2782
    %v2790 = vrot.slane %v2707, 1
    %v2791 = vrot.slane %v2711, 1
    %v2792 = vsel %vm357, %v2790, %v2791
    %v2795 = vsel %vm357, %v2791, 0.0
    %v2796 = vadd.f32 %v2760, %v2792
    %v2797 = vadd.f32 %v2764, %v2795
    %v2800 = vrot.slane %v2772, 7
    %v2801 = vrot.slane %v2776, 7
    %v2802 = vsel %vm339, %v2800, %v2801
    %v2805 = vsel %vm339, 0.0, %v2800
    %v2806 = vadd.f32 %v2719, %v2805
    %v2807 = vadd.f32 %v2723, %v2802
    %v2810 = vrot.slane %v2717, 1
    %v2811 = vrot.slane %v2721, 1
    %v2812 = vsel %vm357, %v2810, %v2811
    %v2815 = vsel %vm357, %v2811, 0.0
    %v2816 = vadd.f32 %v2770, %v2812
    %v2817 = vadd.f32 %v2774, %v2815
    %v2818 = vtanh.pop %v2786
    %v2819 = vtanh.pop %v2787
    %v2820 = vtanh.pop %v2796
    %v2821 = vtanh.pop %v2797
    %v2822 = vtanh.pop %v2806
    %v2823 = vtanh.pop %v2807
    %v2824 = vtanh.pop %v2816
    %v2825 = vtanh.pop %v2817
    %2826 = vst [vmem:[%s8] sm:$0xff] %v2818
    %2827 = vst [vmem:[%s8 + $0x8] sm:$0xff] %v2819
    %2828 = vst [vmem:[%s8 + $0x10] sm:$0xff] %v2820
    %2829 = vst [vmem:[%s8 + $0x18] sm:$0xff] %v2821
    %2830 = vst [vmem:[%s8 + $0x20] sm:$0xff] %v2822
    %2831 = vst [vmem:[%s8 + $0x28] sm:$0xff] %v2823
    %2832 = vst [vmem:[%s8 + $0x30] sm:$0xff] %v2824
    %2833 = vst [vmem:[%s8 + $0x38] sm:$0xff] %v2825
    // Predicated region
    $region50: #{generator_pix_forward.1} parent=1 // pred_check
      _
    $region51: #{generator_pix_forward.1} parent=1 // pred_check_branch
      %2835 = sbr.rel (0) target = $region53
    $region52: #{generator_pix_forward.1} parent=1 // pred_region
      _
    $region53: #{generator_pix_forward.1} parent=1 // pred_fallthru
      _
    // Predicated region
    $region54: #{generator_pix_forward.1} parent=1 // pred_check
      _
    $region55: #{generator_pix_forward.1} parent=1 // pred_check_branch
      %2837 = sbr.rel (0) target = $region57
    $region56: #{generator_pix_forward.1} parent=1 // pred_region
      _
    $region57: #{generator_pix_forward.1} parent=1 // pred_fallthru
      _
    %2838 = vsyncpa [#allocation3], 1
    %2839 = vsyncpa [#allocation5], 1
    %2840 = vsyncpa [#allocation8], 1

</llo_original>
